<compile_context>
chip_gen: v5e
topology: v5e:2x2
jax: 0.10.0
libtpu: 0.0.40
codegen_flags: <defaults>
</compile_context>

<pallas_src>
import functools
import math

import jax
import jax.numpy as jnp
from jax.experimental import pallas as pl
from jax.experimental.pallas import tpu as pltpu


# ---------------------------------------------------------------------------
# fused whole-model kernel: (encoder layer x L) -> fc_out, one batch per grid step
# ---------------------------------------------------------------------------

def _model_kernel(x_ref, wqkv_ref, bqkv_ref, wo_ref, bo_ref,
                  ln1g_ref, ln1b_ref, w1_ref, b1_ref, w2_ref, b2_ref,
                  ln2g_ref, ln2b_ref, wout_ref, bout_ref, logits_ref,
                  *, num_layers, num_heads, scale, eps):
    D = x_ref.shape[-1]
    dk = D // num_heads

    def layer_norm(v, g, b):
        mu = jnp.mean(v, axis=-1, keepdims=True)
        vc = v - mu
        var = jnp.mean(vc * vc, axis=-1, keepdims=True)
        return vc * jax.lax.rsqrt(var + eps) * g + b

    x = x_ref[...]                                              # (S, D) f32

    for l in range(num_layers):                                 # static unroll
        # ---- fused Q/K/V projection: (S, D) @ (D, 3D) ----
        qkv = jnp.dot(x.astype(jnp.bfloat16), wqkv_ref[l],
                      preferred_element_type=jnp.float32) + bqkv_ref[l]   # (S, 3D) f32

        # ---- multi-head attention (mask=None in the module) ----
        heads = []
        for h in range(num_heads):                              # static unroll
            q_h = qkv[:, h * dk:(h + 1) * dk].astype(jnp.bfloat16)
            k_h = qkv[:, D + h * dk:D + (h + 1) * dk].astype(jnp.bfloat16)
            v_h = qkv[:, 2 * D + h * dk:2 * D + (h + 1) * dk].astype(jnp.bfloat16)
            # q @ k^T without an explicit transpose: contract the last dims.
            s = jax.lax.dot_general(q_h, k_h, (((1,), (1,)), ((), ())),
                                    preferred_element_type=jnp.float32) * scale
            s = s - jnp.max(s, axis=-1, keepdims=True)          # softmax in f32
            p = jnp.exp(s)
            p = p * pl.reciprocal(jnp.sum(p, axis=-1, keepdims=True), approx=True)
            heads.append(jnp.dot(p.astype(jnp.bfloat16), v_h,
                                 preferred_element_type=jnp.float32))     # (S, dk)
        a = jnp.concatenate(heads, axis=-1)                     # (S, D) f32

        attn = jnp.dot(a.astype(jnp.bfloat16), wo_ref[l],
                       preferred_element_type=jnp.float32) + bo_ref[l]

        # x = self_atten + dropout1(x); dropout is identity in eval mode.
        x1 = layer_norm(attn + x, ln1g_ref[l], ln1b_ref[l])

        # ---- FFN: linear1 -> ReLU -> dropout(identity) -> linear2 ----
        h1 = jnp.dot(x1.astype(jnp.bfloat16), w1_ref[l],
                     preferred_element_type=jnp.float32) + b1_ref[l]
        h1 = jnp.maximum(h1, 0.0)
        # TODO(synk): training-mode dropout(p=0.1) would mask h1 via pltpu.prng_random_bits;
        # the module is evaluated in inference mode, so dropout is identity.
        ff = jnp.dot(h1.astype(jnp.bfloat16), w2_ref[l],
                     preferred_element_type=jnp.float32) + b2_ref[l]

        # x = ff + dropout2(x); dropout is identity in eval mode.
        x = layer_norm(ff + x1, ln2g_ref[l], ln2b_ref[l])

    # ---- fc_out (vocab padded to 128 lanes -> unmasked lane-dense store) ----
    logits = jnp.dot(x.astype(jnp.bfloat16), wout_ref[...],
                     preferred_element_type=jnp.float32) + bout_ref[...]
    logits_ref[...] = logits.astype(logits_ref.dtype)


def encoder_forward_fused(x_emb, params, *, num_heads):
    """x_emb: (B, S, D) f32 embedded+positional input. Returns padded logits (B, S, Vp)."""
    B, S, D = x_emb.shape
    L = params["wqkv"].shape[0]
    F = params["w1"].shape[2]
    Vp = params["w_out"].shape[1]
    dk = D // num_heads

    kernel = functools.partial(_model_kernel, num_layers=L, num_heads=num_heads,
                               scale=1.0 / math.sqrt(dk), eps=1e-5)

    def const(shape):
        # Grid-invariant (weights resident in VMEM; same block index every step,
        # so the pipeline fetches it once).
        return pl.BlockSpec(shape, lambda b, _s=shape: (0,) * len(_s))

    grid_spec = pltpu.PrefetchScalarGridSpec(
        num_scalar_prefetch=0,
        grid=(B,),                                           # one batch per step
        in_specs=[
            pl.BlockSpec((None, S, D), lambda b: (b, 0, 0)),  # x (per-batch block)
            const((L, D, 3 * D)),                             # wqkv (bf16)
            const((L, 1, 3 * D)),                             # bqkv (f32)
            const((L, D, D)),                                 # wo
            const((L, 1, D)),                                 # bo
            const((L, 1, D)),                                 # ln1 gamma
            const((L, 1, D)),                                 # ln1 beta
            const((L, D, F)),                                 # w1
            const((L, 1, F)),                                 # b1
            const((L, F, D)),                                 # w2
            const((L, 1, D)),                                 # b2
            const((L, 1, D)),                                 # ln2 gamma
            const((L, 1, D)),                                 # ln2 beta
            const((D, Vp)),                                   # w_out (padded to 128)
            const((1, Vp)),                                   # b_out
        ],
        out_specs=pl.BlockSpec((None, S, Vp), lambda b: (b, 0, 0)),
    )
    return pl.pallas_call(
        kernel,
        out_shape=jax.ShapeDtypeStruct((B, S, Vp), jnp.float32),
        grid_spec=grid_spec,
        # Default scoped-VMEM limit is ample (<1 MiB resident); no override needed,
        # which also keeps headroom on v7x's 64 MiB VMEM.
        compiler_params=pltpu.CompilerParams(dimension_semantics=("parallel",)),
    )(x_emb, params["wqkv"], params["bqkv"], params["wo"], params["bo"],
      params["ln1_g"], params["ln1_b"], params["w1"], params["b1"],
      params["w2"], params["b2"], params["ln2_g"], params["ln2_b"],
      params["w_out"], params["b_out"])


# ---------------------------------------------------------------------------
# full forward: embedding + positional (XLA) -> fused kernel -> softmax/argmax
# ---------------------------------------------------------------------------

@functools.partial(jax.jit, static_argnames=("num_heads",))
def seq_encoder_only_forward(params, tokens, *, num_heads):
    B, S = tokens.shape
    # TODO(synk): the embedding gather dic[x-1] and positional-encoding add stay in XLA;
    # an irregular row gather has no clean block-rectangular Pallas tiling at this size.
    h = params["dic"][tokens - 1]                          # (B, S, D)
    h = h + params["pos"][:S][None, :, :]
    logits_pad = encoder_forward_fused(h, params, num_heads=num_heads)   # (B, S, 128)
    logits = logits_pad[..., :100].reshape(B * S, 100)     # == logits.view(-1, 100)
    distribution = jax.nn.softmax(logits, axis=-1)
    pred = jnp.argmax(distribution, axis=-1).reshape(B, S)
    return logits, pred


# ---------------------------------------------------------------------------
# parameter init (PyTorch nn.Linear / nn.LayerNorm defaults; matmul weights bf16)
# ---------------------------------------------------------------------------

def _linear_init(key, fan_in, fan_out):
    kw, kb = jax.random.split(key)
    bound = 1.0 / math.sqrt(fan_in)
    w = jax.random.uniform(kw, (fan_in, fan_out), jnp.float32, -bound, bound)
    b = jax.random.uniform(kb, (fan_out,), jnp.float32, -bound, bound)
    return w, b


def _positional_encoding(d_model, max_len=10):
    position = jnp.arange(max_len, dtype=jnp.float32)[:, None]
    div_term = jnp.exp(jnp.arange(0, d_model, 2, dtype=jnp.float32)
                       * (-math.log(10000.0) / d_model))
    pe = jnp.zeros((max_len, d_model), jnp.float32)
    pe = pe.at[:, 0::2].set(jnp.sin(position * div_term))
    pe = pe.at[:, 1::2].set(jnp.cos(position * div_term))
    return pe


def init_params(key, d_token, num_heads, d_ff, num_layers, vocab=100, vocab_pad=128):
    assert d_token % num_heads == 0, "d_token is not divisible by num_heads"
    keys = jax.random.split(key, num_layers + 2)
    dic = jax.random.normal(keys[0], (vocab, d_token), jnp.float32)   # seq_embedding.dic

    wqkv, bqkv, wo, bo, w1, b1, w2, b2 = [], [], [], [], [], [], [], []
    for l in range(num_layers):
        lk = jax.random.split(keys[1 + l], 6)
        wq, bq_ = _linear_init(lk[0], d_token, d_token)
        wk, bk_ = _linear_init(lk[1], d_token, d_token)
        wv, bv_ = _linear_init(lk[2], d_token, d_token)
        wo_l, bo_l = _linear_init(lk[3], d_token, d_token)
        w1_l, b1_l = _linear_init(lk[4], d_token, d_ff)
        w2_l, b2_l = _linear_init(lk[5], d_ff, d_token)
        wqkv.append(jnp.concatenate([wq, wk, wv], axis=1))            # (D, 3D)
        bqkv.append(jnp.concatenate([bq_, bk_, bv_])[None, :])        # (1, 3D)
        wo.append(wo_l); bo.append(bo_l[None, :])
        w1.append(w1_l); b1.append(b1_l[None, :])
        w2.append(w2_l); b2.append(b2_l[None, :])

    w_out, b_out = _linear_init(keys[-1], d_token, vocab)
    # Pad fc_out vocab 100 -> 128 for lane-dense stores; padded columns are zero
    # and are sliced off before softmax/argmax.
    w_out = jnp.pad(w_out, ((0, 0), (0, vocab_pad - vocab)))
    b_out = jnp.pad(b_out, ((0, vocab_pad - vocab),))[None, :]

    ones = jnp.ones((num_layers, 1, d_token), jnp.float32)
    zeros = jnp.zeros((num_layers, 1, d_token), jnp.float32)
    # Note: cls_token is defined by the module but never used in forward(); omitted.
    return dict(
        dic=dic, pos=_positional_encoding(d_token),
        wqkv=jnp.stack(wqkv).astype(jnp.bfloat16), bqkv=jnp.stack(bqkv),
        wo=jnp.stack(wo).astype(jnp.bfloat16), bo=jnp.stack(bo),
        w1=jnp.stack(w1).astype(jnp.bfloat16), b1=jnp.stack(b1),
        w2=jnp.stack(w2).astype(jnp.bfloat16), b2=jnp.stack(b2),
        ln1_g=ones, ln1_b=zeros, ln2_g=ones, ln2_b=zeros,
        w_out=w_out.astype(jnp.bfloat16), b_out=b_out)


# ---------------------------------------------------------------------------
# pure-JAX reference (dropout = identity, eval mode)
# ---------------------------------------------------------------------------

def _reference_forward(params, tokens, num_heads, *, bf16_matmul):
    def mm(a, b):
        if bf16_matmul:
            return jnp.dot(a.astype(jnp.bfloat16), b.astype(jnp.bfloat16),
                           preferred_element_type=jnp.float32)
        return jnp.dot(a.astype(jnp.float32), b.astype(jnp.float32),
                       precision=jax.lax.Precision.HIGHEST)

    def ln(x, g, b, eps=1e-5):
        mu = jnp.mean(x, -1, keepdims=True)
        xc = x - mu
        var = jnp.mean(xc * xc, -1, keepdims=True)
        return xc * jax.lax.rsqrt(var + eps) * g + b

    B, S = tokens.shape
    D = params["dic"].shape[1]
    H, dk = num_heads, params["dic"].shape[1] // num_heads
    L = params["wqkv"].shape[0]
    x = params["dic"][tokens - 1] + params["pos"][:S][None]           # (B, S, D)
    for l in range(L):
        qkv = mm(x, params["wqkv"][l]) + params["bqkv"][l]            # (B, S, 3D)
        q, k, v = qkv[..., :D], qkv[..., D:2 * D], qkv[..., 2 * D:]
        q = q.reshape(B, S, H, dk).transpose(0, 2, 1, 3)
        k = k.reshape(B, S, H, dk).transpose(0, 2, 1, 3)
        v = v.reshape(B, S, H, dk).transpose(0, 2, 1, 3)
        if bf16_matmul:
            s = jnp.einsum("bhqd,bhkd->bhqk", q.astype(jnp.bfloat16),
                           k.astype(jnp.bfloat16),
                           preferred_element_type=jnp.float32) / math.sqrt(dk)
        else:
            s = jnp.einsum("bhqd,bhkd->bhqk", q, k,
                           precision=jax.lax.Precision.HIGHEST) / math.sqrt(dk)
        s = s - jnp.max(s, -1, keepdims=True)
        p = jnp.exp(s)
        p = p / jnp.sum(p, -1, keepdims=True)
        if bf16_matmul:
            a = jnp.einsum("bhqk,bhkd->bhqd", p.astype(jnp.bfloat16),
                           v.astype(jnp.bfloat16), preferred_element_type=jnp.float32)
        else:
            a = jnp.einsum("bhqk,bhkd->bhqd", p, v,
                           precision=jax.lax.Precision.HIGHEST)
        a = a.transpose(0, 2, 1, 3).reshape(B, S, D)
        attn = mm(a, params["wo"][l]) + params["bo"][l]
        x1 = ln(attn + x, params["ln1_g"][l], params["ln1_b"][l])
        h1 = jnp.maximum(mm(x1, params["w1"][l]) + params["b1"][l], 0.0)
        ff = mm(h1, params["w2"][l]) + params["b2"][l]
        x = ln(ff + x1, params["ln2_g"][l], params["ln2_b"][l])
    logits = (mm(x, params["w_out"]) + params["b_out"])[..., :100].reshape(B * S, 100)
    pred = jnp.argmax(jax.nn.softmax(logits, -1), -1).reshape(B, S)
    return logits, pred


# ---------------------------------------------------------------------------
# demo / self-check
# ---------------------------------------------------------------------------

if __name__ == "__main__":
    # Small shapes consistent with the module: d_token=32, num_heads=4, d_ff=64,
    # num_layers=2, batch=2, seq=8 (<= PositionalEncoding max_len=10), vocab=100.
    config = dict(d_token=32, num_heads=4, d_ff=64, num_layers=2, dropout=0.1)
    B, S = 2, 8

    key = jax.random.PRNGKey(0)
    k_param, k_tok = jax.random.split(key)
    params = init_params(k_param, config["d_token"], config["num_heads"],
                         config["d_ff"], config["num_layers"])
    tokens = jax.random.randint(k_tok, (B, S), 1, 101, dtype=jnp.int32)

    logits, pred = seq_encoder_only_forward(params, tokens,
                                            num_heads=config["num_heads"])
    logits, pred = jax.block_until_ready((logits, pred))

    assert logits.shape == (B * S, 100) and pred.shape == (B, S)

    # Check 1: pure-JAX mirror with the same bf16-operand / f32-accumulate matmuls
    # (tolerance covers the EUP approx-reciprocal in the kernel softmax).
    ref_bf16 = jax.jit(functools.partial(_reference_forward,
                                         num_heads=config["num_heads"],
                                         bf16_matmul=True))
    ref_logits, _ = ref_bf16(params, tokens)
    assert jnp.allclose(logits, ref_logits, atol=2e-2, rtol=2e-2), \
        "mismatch vs bf16-matched reference"

    # Check 2: full-f32 matmul reference (PyTorch-module numerics); bf16 MXU operands
    # keep the kernel within a loose tolerance of it.
    ref_f32 = jax.jit(functools.partial(_reference_forward,
                                        num_heads=config["num_heads"],
                                        bf16_matmul=False))
    ref32_logits, _ = ref_f32(params, tokens)
    assert float(jnp.max(jnp.abs(logits - ref32_logits))) < 0.35, \
        "too far from f32 reference"

    print("KERNEL_OK")
</pallas_src>

<mosaic_0001>
module attributes {stable_mosaic.version = 11 : i64} {
  func.func @_model_kernel(%arg0: i32, %arg1: memref<1x8x32xf32, #tpu.memory_space<vmem>>, %arg2: memref<2x32x96xbf16, #tpu.memory_space<vmem>>, %arg3: memref<2x1x96xf32, #tpu.memory_space<vmem>>, %arg4: memref<2x32x32xbf16, #tpu.memory_space<vmem>>, %arg5: memref<2x1x32xf32, #tpu.memory_space<vmem>>, %arg6: memref<2x1x32xf32, #tpu.memory_space<vmem>>, %arg7: memref<2x1x32xf32, #tpu.memory_space<vmem>>, %arg8: memref<2x32x64xbf16, #tpu.memory_space<vmem>>, %arg9: memref<2x1x64xf32, #tpu.memory_space<vmem>>, %arg10: memref<2x64x32xbf16, #tpu.memory_space<vmem>>, %arg11: memref<2x1x32xf32, #tpu.memory_space<vmem>>, %arg12: memref<2x1x32xf32, #tpu.memory_space<vmem>>, %arg13: memref<2x1x32xf32, #tpu.memory_space<vmem>>, %arg14: memref<32x128xbf16, #tpu.memory_space<vmem>>, %arg15: memref<1x128xf32, #tpu.memory_space<vmem>>, %arg16: memref<1x8x128xf32, #tpu.memory_space<vmem>>) attributes {dimension_semantics = [#tpu.dimension_semantics<parallel>], iteration_bounds = array<i64: 2>, scalar_prefetch = 0 : i64, scratch_operands = 0 : i64, tpu.core_type = #tpu.core_type<tc>, window_params = [{transform_indices = @transform_0, window_bounds = array<i64: 1, 8, 32>}, {pipeline_mode = #tpu.pipeline_mode<synchronous>, transform_indices = @transform_1, window_bounds = array<i64: 2, 32, 96>}, {pipeline_mode = #tpu.pipeline_mode<synchronous>, transform_indices = @transform_2, window_bounds = array<i64: 2, 1, 96>}, {pipeline_mode = #tpu.pipeline_mode<synchronous>, transform_indices = @transform_3, window_bounds = array<i64: 2, 32, 32>}, {pipeline_mode = #tpu.pipeline_mode<synchronous>, transform_indices = @transform_4, window_bounds = array<i64: 2, 1, 32>}, {pipeline_mode = #tpu.pipeline_mode<synchronous>, transform_indices = @transform_5, window_bounds = array<i64: 2, 1, 32>}, {pipeline_mode = #tpu.pipeline_mode<synchronous>, transform_indices = @transform_6, window_bounds = array<i64: 2, 1, 32>}, {pipeline_mode = #tpu.pipeline_mode<synchronous>, transform_indices = @transform_7, window_bounds = array<i64: 2, 32, 64>}, {pipeline_mode = #tpu.pipeline_mode<synchronous>, transform_indices = @transform_8, window_bounds = array<i64: 2, 1, 64>}, {pipeline_mode = #tpu.pipeline_mode<synchronous>, transform_indices = @transform_9, window_bounds = array<i64: 2, 64, 32>}, {pipeline_mode = #tpu.pipeline_mode<synchronous>, transform_indices = @transform_10, window_bounds = array<i64: 2, 1, 32>}, {pipeline_mode = #tpu.pipeline_mode<synchronous>, transform_indices = @transform_11, window_bounds = array<i64: 2, 1, 32>}, {pipeline_mode = #tpu.pipeline_mode<synchronous>, transform_indices = @transform_12, window_bounds = array<i64: 2, 1, 32>}, {pipeline_mode = #tpu.pipeline_mode<synchronous>, transform_indices = @transform_13, window_bounds = array<i64: 32, 128>}, {pipeline_mode = #tpu.pipeline_mode<synchronous>, transform_indices = @transform_14, window_bounds = array<i64: 1, 128>}, {transform_indices = @transform_15, window_bounds = array<i64: 1, 8, 128>}]} {
    %c0 = arith.constant 0 : index
    %c0_0 = arith.constant 0 : index
    %c0_1 = arith.constant 0 : index
    %0 = vector.load %arg1[%c0, %c0_0, %c0_1] : memref<1x8x32xf32, #tpu.memory_space<vmem>>, vector<1x8x32xf32>
    %1 = vector.shape_cast %0 : vector<1x8x32xf32> to vector<8x32xf32>
    %2 = arith.truncf %1 : vector<8x32xf32> to vector<8x32xbf16>
    %c0_2 = arith.constant 0 : index
    %c0_3 = arith.constant 0 : index
    %c0_4 = arith.constant 0 : index
    %3 = vector.load %arg2[%c0_2, %c0_3, %c0_4] : memref<2x32x96xbf16, #tpu.memory_space<vmem>>, vector<1x32x96xbf16>
    %4 = vector.shape_cast %3 : vector<1x32x96xbf16> to vector<32x96xbf16>
    %cst = arith.constant dense<0.000000e+00> : vector<8x96xf32>
    %5 = tpu.matmul %2, %4, %cst {dimension_numbers = #tpu.dot_dimension_numbers<[1], [0], [0], [1], [0, 0, 1, 1], [], []>} : vector<8x32xbf16>, vector<32x96xbf16>, vector<8x96xf32> -> vector<8x96xf32>
    %c0_5 = arith.constant 0 : index
    %c0_6 = arith.constant 0 : index
    %c0_7 = arith.constant 0 : index
    %6 = vector.load %arg3[%c0_5, %c0_6, %c0_7] : memref<2x1x96xf32, #tpu.memory_space<vmem>>, vector<1x1x96xf32>
    %7 = vector.shape_cast %6 : vector<1x1x96xf32> to vector<1x96xf32>
    %8 = vector.broadcast %7 : vector<1x96xf32> to vector<8x96xf32>
    %9 = arith.addf %5, %8 : vector<8x96xf32>
    %10 = vector.extract_strided_slice %9 {offsets = [0, 0], sizes = [8, 8], strides = [1, 1]} : vector<8x96xf32> to vector<8x8xf32>
    %11 = arith.truncf %10 : vector<8x8xf32> to vector<8x8xbf16>
    %12 = vector.extract_strided_slice %9 {offsets = [0, 32], sizes = [8, 8], strides = [1, 1]} : vector<8x96xf32> to vector<8x8xf32>
    %13 = arith.truncf %12 : vector<8x8xf32> to vector<8x8xbf16>
    %14 = vector.extract_strided_slice %9 {offsets = [0, 64], sizes = [8, 8], strides = [1, 1]} : vector<8x96xf32> to vector<8x8xf32>
    %15 = arith.truncf %14 : vector<8x8xf32> to vector<8x8xbf16>
    %cst_8 = arith.constant dense<0.000000e+00> : vector<8x8xf32>
    %16 = tpu.matmul %11, %13, %cst_8 {dimension_numbers = #tpu.dot_dimension_numbers<[1], [1], [0], [0], [0, 0, 1, 0], [], []>} : vector<8x8xbf16>, vector<8x8xbf16>, vector<8x8xf32> -> vector<8x8xf32>
    %cst_9 = arith.constant 0.353553385 : f32
    %17 = vector.broadcast %cst_9 : f32 to vector<8x8xf32>
    %18 = arith.mulf %16, %17 : vector<8x8xf32>
    %cst_10 = arith.constant dense<0xFF800000> : vector<8xf32>
    %19 = vector.multi_reduction <maximumf>, %18, %cst_10 [1] : vector<8x8xf32> to vector<8xf32>
    %20 = vector.shape_cast %19 : vector<8xf32> to vector<8x1xf32>
    %21 = vector.broadcast %20 : vector<8x1xf32> to vector<8x8xf32>
    %22 = arith.subf %18, %21 : vector<8x8xf32>
    %23 = math.exp %22 : vector<8x8xf32>
    %cst_11 = arith.constant dense<0.000000e+00> : vector<8xf32>
    %24 = vector.multi_reduction <add>, %23, %cst_11 [1] : vector<8x8xf32> to vector<8xf32>
    %25 = vector.shape_cast %24 : vector<8xf32> to vector<8x1xf32>
    %26 = tpu.reciprocal %25 {approx = true} : vector<8x1xf32> -> vector<8x1xf32>
    %27 = vector.broadcast %26 : vector<8x1xf32> to vector<8x8xf32>
    %28 = arith.mulf %23, %27 : vector<8x8xf32>
    %29 = arith.truncf %28 : vector<8x8xf32> to vector<8x8xbf16>
    %cst_12 = arith.constant dense<0.000000e+00> : vector<8x8xf32>
    %30 = tpu.matmul %29, %15, %cst_12 {dimension_numbers = #tpu.dot_dimension_numbers<[1], [0], [0], [1], [0, 0, 1, 1], [], []>} : vector<8x8xbf16>, vector<8x8xbf16>, vector<8x8xf32> -> vector<8x8xf32>
    %31 = vector.extract_strided_slice %9 {offsets = [0, 8], sizes = [8, 8], strides = [1, 1]} : vector<8x96xf32> to vector<8x8xf32>
    %32 = arith.truncf %31 : vector<8x8xf32> to vector<8x8xbf16>
    %33 = vector.extract_strided_slice %9 {offsets = [0, 40], sizes = [8, 8], strides = [1, 1]} : vector<8x96xf32> to vector<8x8xf32>
    %34 = arith.truncf %33 : vector<8x8xf32> to vector<8x8xbf16>
    %35 = vector.extract_strided_slice %9 {offsets = [0, 72], sizes = [8, 8], strides = [1, 1]} : vector<8x96xf32> to vector<8x8xf32>
    %36 = arith.truncf %35 : vector<8x8xf32> to vector<8x8xbf16>
    %cst_13 = arith.constant dense<0.000000e+00> : vector<8x8xf32>
    %37 = tpu.matmul %32, %34, %cst_13 {dimension_numbers = #tpu.dot_dimension_numbers<[1], [1], [0], [0], [0, 0, 1, 0], [], []>} : vector<8x8xbf16>, vector<8x8xbf16>, vector<8x8xf32> -> vector<8x8xf32>
    %cst_14 = arith.constant 0.353553385 : f32
    %38 = vector.broadcast %cst_14 : f32 to vector<8x8xf32>
    %39 = arith.mulf %37, %38 : vector<8x8xf32>
    %cst_15 = arith.constant dense<0xFF800000> : vector<8xf32>
    %40 = vector.multi_reduction <maximumf>, %39, %cst_15 [1] : vector<8x8xf32> to vector<8xf32>
    %41 = vector.shape_cast %40 : vector<8xf32> to vector<8x1xf32>
    %42 = vector.broadcast %41 : vector<8x1xf32> to vector<8x8xf32>
    %43 = arith.subf %39, %42 : vector<8x8xf32>
    %44 = math.exp %43 : vector<8x8xf32>
    %cst_16 = arith.constant dense<0.000000e+00> : vector<8xf32>
    %45 = vector.multi_reduction <add>, %44, %cst_16 [1] : vector<8x8xf32> to vector<8xf32>
    %46 = vector.shape_cast %45 : vector<8xf32> to vector<8x1xf32>
    %47 = tpu.reciprocal %46 {approx = true} : vector<8x1xf32> -> vector<8x1xf32>
    %48 = vector.broadcast %47 : vector<8x1xf32> to vector<8x8xf32>
    %49 = arith.mulf %44, %48 : vector<8x8xf32>
    %50 = arith.truncf %49 : vector<8x8xf32> to vector<8x8xbf16>
    %cst_17 = arith.constant dense<0.000000e+00> : vector<8x8xf32>
    %51 = tpu.matmul %50, %36, %cst_17 {dimension_numbers = #tpu.dot_dimension_numbers<[1], [0], [0], [1], [0, 0, 1, 1], [], []>} : vector<8x8xbf16>, vector<8x8xbf16>, vector<8x8xf32> -> vector<8x8xf32>
    %52 = vector.extract_strided_slice %9 {offsets = [0, 16], sizes = [8, 8], strides = [1, 1]} : vector<8x96xf32> to vector<8x8xf32>
    %53 = arith.truncf %52 : vector<8x8xf32> to vector<8x8xbf16>
    %54 = vector.extract_strided_slice %9 {offsets = [0, 48], sizes = [8, 8], strides = [1, 1]} : vector<8x96xf32> to vector<8x8xf32>
    %55 = arith.truncf %54 : vector<8x8xf32> to vector<8x8xbf16>
    %56 = vector.extract_strided_slice %9 {offsets = [0, 80], sizes = [8, 8], strides = [1, 1]} : vector<8x96xf32> to vector<8x8xf32>
    %57 = arith.truncf %56 : vector<8x8xf32> to vector<8x8xbf16>
    %cst_18 = arith.constant dense<0.000000e+00> : vector<8x8xf32>
    %58 = tpu.matmul %53, %55, %cst_18 {dimension_numbers = #tpu.dot_dimension_numbers<[1], [1], [0], [0], [0, 0, 1, 0], [], []>} : vector<8x8xbf16>, vector<8x8xbf16>, vector<8x8xf32> -> vector<8x8xf32>
    %cst_19 = arith.constant 0.353553385 : f32
    %59 = vector.broadcast %cst_19 : f32 to vector<8x8xf32>
    %60 = arith.mulf %58, %59 : vector<8x8xf32>
    %cst_20 = arith.constant dense<0xFF800000> : vector<8xf32>
    %61 = vector.multi_reduction <maximumf>, %60, %cst_20 [1] : vector<8x8xf32> to vector<8xf32>
    %62 = vector.shape_cast %61 : vector<8xf32> to vector<8x1xf32>
    %63 = vector.broadcast %62 : vector<8x1xf32> to vector<8x8xf32>
    %64 = arith.subf %60, %63 : vector<8x8xf32>
    %65 = math.exp %64 : vector<8x8xf32>
    %cst_21 = arith.constant dense<0.000000e+00> : vector<8xf32>
    %66 = vector.multi_reduction <add>, %65, %cst_21 [1] : vector<8x8xf32> to vector<8xf32>
    %67 = vector.shape_cast %66 : vector<8xf32> to vector<8x1xf32>
    %68 = tpu.reciprocal %67 {approx = true} : vector<8x1xf32> -> vector<8x1xf32>
    %69 = vector.broadcast %68 : vector<8x1xf32> to vector<8x8xf32>
    %70 = arith.mulf %65, %69 : vector<8x8xf32>
    %71 = arith.truncf %70 : vector<8x8xf32> to vector<8x8xbf16>
    %cst_22 = arith.constant dense<0.000000e+00> : vector<8x8xf32>
    %72 = tpu.matmul %71, %57, %cst_22 {dimension_numbers = #tpu.dot_dimension_numbers<[1], [0], [0], [1], [0, 0, 1, 1], [], []>} : vector<8x8xbf16>, vector<8x8xbf16>, vector<8x8xf32> -> vector<8x8xf32>
    %73 = vector.extract_strided_slice %9 {offsets = [0, 24], sizes = [8, 8], strides = [1, 1]} : vector<8x96xf32> to vector<8x8xf32>
    %74 = arith.truncf %73 : vector<8x8xf32> to vector<8x8xbf16>
    %75 = vector.extract_strided_slice %9 {offsets = [0, 56], sizes = [8, 8], strides = [1, 1]} : vector<8x96xf32> to vector<8x8xf32>
    %76 = arith.truncf %75 : vector<8x8xf32> to vector<8x8xbf16>
    %77 = vector.extract_strided_slice %9 {offsets = [0, 88], sizes = [8, 8], strides = [1, 1]} : vector<8x96xf32> to vector<8x8xf32>
    %78 = arith.truncf %77 : vector<8x8xf32> to vector<8x8xbf16>
    %cst_23 = arith.constant dense<0.000000e+00> : vector<8x8xf32>
    %79 = tpu.matmul %74, %76, %cst_23 {dimension_numbers = #tpu.dot_dimension_numbers<[1], [1], [0], [0], [0, 0, 1, 0], [], []>} : vector<8x8xbf16>, vector<8x8xbf16>, vector<8x8xf32> -> vector<8x8xf32>
    %cst_24 = arith.constant 0.353553385 : f32
    %80 = vector.broadcast %cst_24 : f32 to vector<8x8xf32>
    %81 = arith.mulf %79, %80 : vector<8x8xf32>
    %cst_25 = arith.constant dense<0xFF800000> : vector<8xf32>
    %82 = vector.multi_reduction <maximumf>, %81, %cst_25 [1] : vector<8x8xf32> to vector<8xf32>
    %83 = vector.shape_cast %82 : vector<8xf32> to vector<8x1xf32>
    %84 = vector.broadcast %83 : vector<8x1xf32> to vector<8x8xf32>
    %85 = arith.subf %81, %84 : vector<8x8xf32>
    %86 = math.exp %85 : vector<8x8xf32>
    %cst_26 = arith.constant dense<0.000000e+00> : vector<8xf32>
    %87 = vector.multi_reduction <add>, %86, %cst_26 [1] : vector<8x8xf32> to vector<8xf32>
    %88 = vector.shape_cast %87 : vector<8xf32> to vector<8x1xf32>
    %89 = tpu.reciprocal %88 {approx = true} : vector<8x1xf32> -> vector<8x1xf32>
    %90 = vector.broadcast %89 : vector<8x1xf32> to vector<8x8xf32>
    %91 = arith.mulf %86, %90 : vector<8x8xf32>
    %92 = arith.truncf %91 : vector<8x8xf32> to vector<8x8xbf16>
    %cst_27 = arith.constant dense<0.000000e+00> : vector<8x8xf32>
    %93 = tpu.matmul %92, %78, %cst_27 {dimension_numbers = #tpu.dot_dimension_numbers<[1], [0], [0], [1], [0, 0, 1, 1], [], []>} : vector<8x8xbf16>, vector<8x8xbf16>, vector<8x8xf32> -> vector<8x8xf32>
    %94 = tpu.concatenate %30, %51, %72, %93 in 1 : vector<8x8xf32>, vector<8x8xf32>, vector<8x8xf32>, vector<8x8xf32> -> vector<8x32xf32>
    %95 = arith.truncf %94 : vector<8x32xf32> to vector<8x32xbf16>
    %c0_28 = arith.constant 0 : index
    %c0_29 = arith.constant 0 : index
    %c0_30 = arith.constant 0 : index
    %96 = vector.load %arg4[%c0_28, %c0_29, %c0_30] : memref<2x32x32xbf16, #tpu.memory_space<vmem>>, vector<1x32x32xbf16>
    %97 = vector.shape_cast %96 : vector<1x32x32xbf16> to vector<32x32xbf16>
    %cst_31 = arith.constant dense<0.000000e+00> : vector<8x32xf32>
    %98 = tpu.matmul %95, %97, %cst_31 {dimension_numbers = #tpu.dot_dimension_numbers<[1], [0], [0], [1], [0, 0, 1, 1], [], []>} : vector<8x32xbf16>, vector<32x32xbf16>, vector<8x32xf32> -> vector<8x32xf32>
    %c0_32 = arith.constant 0 : index
    %c0_33 = arith.constant 0 : index
    %c0_34 = arith.constant 0 : index
    %99 = vector.load %arg5[%c0_32, %c0_33, %c0_34] : memref<2x1x32xf32, #tpu.memory_space<vmem>>, vector<1x1x32xf32>
    %100 = vector.shape_cast %99 : vector<1x1x32xf32> to vector<1x32xf32>
    %101 = vector.broadcast %100 : vector<1x32xf32> to vector<8x32xf32>
    %102 = arith.addf %98, %101 : vector<8x32xf32>
    %103 = arith.addf %102, %1 : vector<8x32xf32>
    %c0_35 = arith.constant 0 : index
    %c0_36 = arith.constant 0 : index
    %c0_37 = arith.constant 0 : index
    %104 = vector.load %arg6[%c0_35, %c0_36, %c0_37] : memref<2x1x32xf32, #tpu.memory_space<vmem>>, vector<1x1x32xf32>
    %105 = vector.shape_cast %104 : vector<1x1x32xf32> to vector<1x32xf32>
    %c0_38 = arith.constant 0 : index
    %c0_39 = arith.constant 0 : index
    %c0_40 = arith.constant 0 : index
    %106 = vector.load %arg7[%c0_38, %c0_39, %c0_40] : memref<2x1x32xf32, #tpu.memory_space<vmem>>, vector<1x1x32xf32>
    %107 = vector.shape_cast %106 : vector<1x1x32xf32> to vector<1x32xf32>
    %cst_41 = arith.constant dense<0.000000e+00> : vector<8xf32>
    %108 = vector.multi_reduction <add>, %103, %cst_41 [1] : vector<8x32xf32> to vector<8xf32>
    %109 = vector.shape_cast %108 : vector<8xf32> to vector<8x1xf32>
    %cst_42 = arith.constant 3.200000e+01 : f32
    %110 = vector.broadcast %cst_42 : f32 to vector<8x1xf32>
    %111 = arith.divf %109, %110 : vector<8x1xf32>
    %112 = vector.broadcast %111 : vector<8x1xf32> to vector<8x32xf32>
    %113 = arith.subf %103, %112 : vector<8x32xf32>
    %114 = arith.mulf %113, %113 : vector<8x32xf32>
    %cst_43 = arith.constant dense<0.000000e+00> : vector<8xf32>
    %115 = vector.multi_reduction <add>, %114, %cst_43 [1] : vector<8x32xf32> to vector<8xf32>
    %116 = vector.shape_cast %115 : vector<8xf32> to vector<8x1xf32>
    %cst_44 = arith.constant 3.200000e+01 : f32
    %117 = vector.broadcast %cst_44 : f32 to vector<8x1xf32>
    %118 = arith.divf %116, %117 : vector<8x1xf32>
    %cst_45 = arith.constant 9.99999974E-6 : f32
    %119 = vector.broadcast %cst_45 : f32 to vector<8x1xf32>
    %120 = arith.addf %118, %119 : vector<8x1xf32>
    %121 = math.rsqrt %120 : vector<8x1xf32>
    %122 = vector.broadcast %121 : vector<8x1xf32> to vector<8x32xf32>
    %123 = arith.mulf %113, %122 : vector<8x32xf32>
    %124 = vector.broadcast %105 : vector<1x32xf32> to vector<8x32xf32>
    %125 = arith.mulf %123, %124 : vector<8x32xf32>
    %126 = vector.broadcast %107 : vector<1x32xf32> to vector<8x32xf32>
    %127 = arith.addf %125, %126 : vector<8x32xf32>
    %128 = arith.truncf %127 : vector<8x32xf32> to vector<8x32xbf16>
    %c0_46 = arith.constant 0 : index
    %c0_47 = arith.constant 0 : index
    %c0_48 = arith.constant 0 : index
    %129 = vector.load %arg8[%c0_46, %c0_47, %c0_48] : memref<2x32x64xbf16, #tpu.memory_space<vmem>>, vector<1x32x64xbf16>
    %130 = vector.shape_cast %129 : vector<1x32x64xbf16> to vector<32x64xbf16>
    %cst_49 = arith.constant dense<0.000000e+00> : vector<8x64xf32>
    %131 = tpu.matmul %128, %130, %cst_49 {dimension_numbers = #tpu.dot_dimension_numbers<[1], [0], [0], [1], [0, 0, 1, 1], [], []>} : vector<8x32xbf16>, vector<32x64xbf16>, vector<8x64xf32> -> vector<8x64xf32>
    %c0_50 = arith.constant 0 : index
    %c0_51 = arith.constant 0 : index
    %c0_52 = arith.constant 0 : index
    %132 = vector.load %arg9[%c0_50, %c0_51, %c0_52] : memref<2x1x64xf32, #tpu.memory_space<vmem>>, vector<1x1x64xf32>
    %133 = vector.shape_cast %132 : vector<1x1x64xf32> to vector<1x64xf32>
    %134 = vector.broadcast %133 : vector<1x64xf32> to vector<8x64xf32>
    %135 = arith.addf %131, %134 : vector<8x64xf32>
    %cst_53 = arith.constant 0.000000e+00 : f32
    %136 = vector.broadcast %cst_53 : f32 to vector<8x64xf32>
    %137 = arith.maximumf %135, %136 : vector<8x64xf32>
    %138 = arith.truncf %137 : vector<8x64xf32> to vector<8x64xbf16>
    %c0_54 = arith.constant 0 : index
    %c0_55 = arith.constant 0 : index
    %c0_56 = arith.constant 0 : index
    %139 = vector.load %arg10[%c0_54, %c0_55, %c0_56] : memref<2x64x32xbf16, #tpu.memory_space<vmem>>, vector<1x64x32xbf16>
    %140 = vector.shape_cast %139 : vector<1x64x32xbf16> to vector<64x32xbf16>
    %cst_57 = arith.constant dense<0.000000e+00> : vector<8x32xf32>
    %141 = tpu.matmul %138, %140, %cst_57 {dimension_numbers = #tpu.dot_dimension_numbers<[1], [0], [0], [1], [0, 0, 1, 1], [], []>} : vector<8x64xbf16>, vector<64x32xbf16>, vector<8x32xf32> -> vector<8x32xf32>
    %c0_58 = arith.constant 0 : index
    %c0_59 = arith.constant 0 : index
    %c0_60 = arith.constant 0 : index
    %142 = vector.load %arg11[%c0_58, %c0_59, %c0_60] : memref<2x1x32xf32, #tpu.memory_space<vmem>>, vector<1x1x32xf32>
    %143 = vector.shape_cast %142 : vector<1x1x32xf32> to vector<1x32xf32>
    %144 = vector.broadcast %143 : vector<1x32xf32> to vector<8x32xf32>
    %145 = arith.addf %141, %144 : vector<8x32xf32>
    %146 = arith.addf %145, %127 : vector<8x32xf32>
    %c0_61 = arith.constant 0 : index
    %c0_62 = arith.constant 0 : index
    %c0_63 = arith.constant 0 : index
    %147 = vector.load %arg12[%c0_61, %c0_62, %c0_63] : memref<2x1x32xf32, #tpu.memory_space<vmem>>, vector<1x1x32xf32>
    %148 = vector.shape_cast %147 : vector<1x1x32xf32> to vector<1x32xf32>
    %c0_64 = arith.constant 0 : index
    %c0_65 = arith.constant 0 : index
    %c0_66 = arith.constant 0 : index
    %149 = vector.load %arg13[%c0_64, %c0_65, %c0_66] : memref<2x1x32xf32, #tpu.memory_space<vmem>>, vector<1x1x32xf32>
    %150 = vector.shape_cast %149 : vector<1x1x32xf32> to vector<1x32xf32>
    %cst_67 = arith.constant dense<0.000000e+00> : vector<8xf32>
    %151 = vector.multi_reduction <add>, %146, %cst_67 [1] : vector<8x32xf32> to vector<8xf32>
    %152 = vector.shape_cast %151 : vector<8xf32> to vector<8x1xf32>
    %cst_68 = arith.constant 3.200000e+01 : f32
    %153 = vector.broadcast %cst_68 : f32 to vector<8x1xf32>
    %154 = arith.divf %152, %153 : vector<8x1xf32>
    %155 = vector.broadcast %154 : vector<8x1xf32> to vector<8x32xf32>
    %156 = arith.subf %146, %155 : vector<8x32xf32>
    %157 = arith.mulf %156, %156 : vector<8x32xf32>
    %cst_69 = arith.constant dense<0.000000e+00> : vector<8xf32>
    %158 = vector.multi_reduction <add>, %157, %cst_69 [1] : vector<8x32xf32> to vector<8xf32>
    %159 = vector.shape_cast %158 : vector<8xf32> to vector<8x1xf32>
    %cst_70 = arith.constant 3.200000e+01 : f32
    %160 = vector.broadcast %cst_70 : f32 to vector<8x1xf32>
    %161 = arith.divf %159, %160 : vector<8x1xf32>
    %cst_71 = arith.constant 9.99999974E-6 : f32
    %162 = vector.broadcast %cst_71 : f32 to vector<8x1xf32>
    %163 = arith.addf %161, %162 : vector<8x1xf32>
    %164 = math.rsqrt %163 : vector<8x1xf32>
    %165 = vector.broadcast %164 : vector<8x1xf32> to vector<8x32xf32>
    %166 = arith.mulf %156, %165 : vector<8x32xf32>
    %167 = vector.broadcast %148 : vector<1x32xf32> to vector<8x32xf32>
    %168 = arith.mulf %166, %167 : vector<8x32xf32>
    %169 = vector.broadcast %150 : vector<1x32xf32> to vector<8x32xf32>
    %170 = arith.addf %168, %169 : vector<8x32xf32>
    %171 = arith.truncf %170 : vector<8x32xf32> to vector<8x32xbf16>
    %c1 = arith.constant 1 : index
    %c0_72 = arith.constant 0 : index
    %c0_73 = arith.constant 0 : index
    %172 = vector.load %arg2[%c1, %c0_72, %c0_73] : memref<2x32x96xbf16, #tpu.memory_space<vmem>>, vector<1x32x96xbf16>
    %173 = vector.shape_cast %172 : vector<1x32x96xbf16> to vector<32x96xbf16>
    %cst_74 = arith.constant dense<0.000000e+00> : vector<8x96xf32>
    %174 = tpu.matmul %171, %173, %cst_74 {dimension_numbers = #tpu.dot_dimension_numbers<[1], [0], [0], [1], [0, 0, 1, 1], [], []>} : vector<8x32xbf16>, vector<32x96xbf16>, vector<8x96xf32> -> vector<8x96xf32>
    %c1_75 = arith.constant 1 : index
    %c0_76 = arith.constant 0 : index
    %c0_77 = arith.constant 0 : index
    %175 = vector.load %arg3[%c1_75, %c0_76, %c0_77] : memref<2x1x96xf32, #tpu.memory_space<vmem>>, vector<1x1x96xf32>
    %176 = vector.shape_cast %175 : vector<1x1x96xf32> to vector<1x96xf32>
    %177 = vector.broadcast %176 : vector<1x96xf32> to vector<8x96xf32>
    %178 = arith.addf %174, %177 : vector<8x96xf32>
    %179 = vector.extract_strided_slice %178 {offsets = [0, 0], sizes = [8, 8], strides = [1, 1]} : vector<8x96xf32> to vector<8x8xf32>
    %180 = arith.truncf %179 : vector<8x8xf32> to vector<8x8xbf16>
    %181 = vector.extract_strided_slice %178 {offsets = [0, 32], sizes = [8, 8], strides = [1, 1]} : vector<8x96xf32> to vector<8x8xf32>
    %182 = arith.truncf %181 : vector<8x8xf32> to vector<8x8xbf16>
    %183 = vector.extract_strided_slice %178 {offsets = [0, 64], sizes = [8, 8], strides = [1, 1]} : vector<8x96xf32> to vector<8x8xf32>
    %184 = arith.truncf %183 : vector<8x8xf32> to vector<8x8xbf16>
    %cst_78 = arith.constant dense<0.000000e+00> : vector<8x8xf32>
    %185 = tpu.matmul %180, %182, %cst_78 {dimension_numbers = #tpu.dot_dimension_numbers<[1], [1], [0], [0], [0, 0, 1, 0], [], []>} : vector<8x8xbf16>, vector<8x8xbf16>, vector<8x8xf32> -> vector<8x8xf32>
    %cst_79 = arith.constant 0.353553385 : f32
    %186 = vector.broadcast %cst_79 : f32 to vector<8x8xf32>
    %187 = arith.mulf %185, %186 : vector<8x8xf32>
    %cst_80 = arith.constant dense<0xFF800000> : vector<8xf32>
    %188 = vector.multi_reduction <maximumf>, %187, %cst_80 [1] : vector<8x8xf32> to vector<8xf32>
    %189 = vector.shape_cast %188 : vector<8xf32> to vector<8x1xf32>
    %190 = vector.broadcast %189 : vector<8x1xf32> to vector<8x8xf32>
    %191 = arith.subf %187, %190 : vector<8x8xf32>
    %192 = math.exp %191 : vector<8x8xf32>
    %cst_81 = arith.constant dense<0.000000e+00> : vector<8xf32>
    %193 = vector.multi_reduction <add>, %192, %cst_81 [1] : vector<8x8xf32> to vector<8xf32>
    %194 = vector.shape_cast %193 : vector<8xf32> to vector<8x1xf32>
    %195 = tpu.reciprocal %194 {approx = true} : vector<8x1xf32> -> vector<8x1xf32>
    %196 = vector.broadcast %195 : vector<8x1xf32> to vector<8x8xf32>
    %197 = arith.mulf %192, %196 : vector<8x8xf32>
    %198 = arith.truncf %197 : vector<8x8xf32> to vector<8x8xbf16>
    %cst_82 = arith.constant dense<0.000000e+00> : vector<8x8xf32>
    %199 = tpu.matmul %198, %184, %cst_82 {dimension_numbers = #tpu.dot_dimension_numbers<[1], [0], [0], [1], [0, 0, 1, 1], [], []>} : vector<8x8xbf16>, vector<8x8xbf16>, vector<8x8xf32> -> vector<8x8xf32>
    %200 = vector.extract_strided_slice %178 {offsets = [0, 8], sizes = [8, 8], strides = [1, 1]} : vector<8x96xf32> to vector<8x8xf32>
    %201 = arith.truncf %200 : vector<8x8xf32> to vector<8x8xbf16>
    %202 = vector.extract_strided_slice %178 {offsets = [0, 40], sizes = [8, 8], strides = [1, 1]} : vector<8x96xf32> to vector<8x8xf32>
    %203 = arith.truncf %202 : vector<8x8xf32> to vector<8x8xbf16>
    %204 = vector.extract_strided_slice %178 {offsets = [0, 72], sizes = [8, 8], strides = [1, 1]} : vector<8x96xf32> to vector<8x8xf32>
    %205 = arith.truncf %204 : vector<8x8xf32> to vector<8x8xbf16>
    %cst_83 = arith.constant dense<0.000000e+00> : vector<8x8xf32>
    %206 = tpu.matmul %201, %203, %cst_83 {dimension_numbers = #tpu.dot_dimension_numbers<[1], [1], [0], [0], [0, 0, 1, 0], [], []>} : vector<8x8xbf16>, vector<8x8xbf16>, vector<8x8xf32> -> vector<8x8xf32>
    %cst_84 = arith.constant 0.353553385 : f32
    %207 = vector.broadcast %cst_84 : f32 to vector<8x8xf32>
    %208 = arith.mulf %206, %207 : vector<8x8xf32>
    %cst_85 = arith.constant dense<0xFF800000> : vector<8xf32>
    %209 = vector.multi_reduction <maximumf>, %208, %cst_85 [1] : vector<8x8xf32> to vector<8xf32>
    %210 = vector.shape_cast %209 : vector<8xf32> to vector<8x1xf32>
    %211 = vector.broadcast %210 : vector<8x1xf32> to vector<8x8xf32>
    %212 = arith.subf %208, %211 : vector<8x8xf32>
    %213 = math.exp %212 : vector<8x8xf32>
    %cst_86 = arith.constant dense<0.000000e+00> : vector<8xf32>
    %214 = vector.multi_reduction <add>, %213, %cst_86 [1] : vector<8x8xf32> to vector<8xf32>
    %215 = vector.shape_cast %214 : vector<8xf32> to vector<8x1xf32>
    %216 = tpu.reciprocal %215 {approx = true} : vector<8x1xf32> -> vector<8x1xf32>
    %217 = vector.broadcast %216 : vector<8x1xf32> to vector<8x8xf32>
    %218 = arith.mulf %213, %217 : vector<8x8xf32>
    %219 = arith.truncf %218 : vector<8x8xf32> to vector<8x8xbf16>
    %cst_87 = arith.constant dense<0.000000e+00> : vector<8x8xf32>
    %220 = tpu.matmul %219, %205, %cst_87 {dimension_numbers = #tpu.dot_dimension_numbers<[1], [0], [0], [1], [0, 0, 1, 1], [], []>} : vector<8x8xbf16>, vector<8x8xbf16>, vector<8x8xf32> -> vector<8x8xf32>
    %221 = vector.extract_strided_slice %178 {offsets = [0, 16], sizes = [8, 8], strides = [1, 1]} : vector<8x96xf32> to vector<8x8xf32>
    %222 = arith.truncf %221 : vector<8x8xf32> to vector<8x8xbf16>
    %223 = vector.extract_strided_slice %178 {offsets = [0, 48], sizes = [8, 8], strides = [1, 1]} : vector<8x96xf32> to vector<8x8xf32>
    %224 = arith.truncf %223 : vector<8x8xf32> to vector<8x8xbf16>
    %225 = vector.extract_strided_slice %178 {offsets = [0, 80], sizes = [8, 8], strides = [1, 1]} : vector<8x96xf32> to vector<8x8xf32>
    %226 = arith.truncf %225 : vector<8x8xf32> to vector<8x8xbf16>
    %cst_88 = arith.constant dense<0.000000e+00> : vector<8x8xf32>
    %227 = tpu.matmul %222, %224, %cst_88 {dimension_numbers = #tpu.dot_dimension_numbers<[1], [1], [0], [0], [0, 0, 1, 0], [], []>} : vector<8x8xbf16>, vector<8x8xbf16>, vector<8x8xf32> -> vector<8x8xf32>
    %cst_89 = arith.constant 0.353553385 : f32
    %228 = vector.broadcast %cst_89 : f32 to vector<8x8xf32>
    %229 = arith.mulf %227, %228 : vector<8x8xf32>
    %cst_90 = arith.constant dense<0xFF800000> : vector<8xf32>
    %230 = vector.multi_reduction <maximumf>, %229, %cst_90 [1] : vector<8x8xf32> to vector<8xf32>
    %231 = vector.shape_cast %230 : vector<8xf32> to vector<8x1xf32>
    %232 = vector.broadcast %231 : vector<8x1xf32> to vector<8x8xf32>
    %233 = arith.subf %229, %232 : vector<8x8xf32>
    %234 = math.exp %233 : vector<8x8xf32>
    %cst_91 = arith.constant dense<0.000000e+00> : vector<8xf32>
    %235 = vector.multi_reduction <add>, %234, %cst_91 [1] : vector<8x8xf32> to vector<8xf32>
    %236 = vector.shape_cast %235 : vector<8xf32> to vector<8x1xf32>
    %237 = tpu.reciprocal %236 {approx = true} : vector<8x1xf32> -> vector<8x1xf32>
    %238 = vector.broadcast %237 : vector<8x1xf32> to vector<8x8xf32>
    %239 = arith.mulf %234, %238 : vector<8x8xf32>
    %240 = arith.truncf %239 : vector<8x8xf32> to vector<8x8xbf16>
    %cst_92 = arith.constant dense<0.000000e+00> : vector<8x8xf32>
    %241 = tpu.matmul %240, %226, %cst_92 {dimension_numbers = #tpu.dot_dimension_numbers<[1], [0], [0], [1], [0, 0, 1, 1], [], []>} : vector<8x8xbf16>, vector<8x8xbf16>, vector<8x8xf32> -> vector<8x8xf32>
    %242 = vector.extract_strided_slice %178 {offsets = [0, 24], sizes = [8, 8], strides = [1, 1]} : vector<8x96xf32> to vector<8x8xf32>
    %243 = arith.truncf %242 : vector<8x8xf32> to vector<8x8xbf16>
    %244 = vector.extract_strided_slice %178 {offsets = [0, 56], sizes = [8, 8], strides = [1, 1]} : vector<8x96xf32> to vector<8x8xf32>
    %245 = arith.truncf %244 : vector<8x8xf32> to vector<8x8xbf16>
    %246 = vector.extract_strided_slice %178 {offsets = [0, 88], sizes = [8, 8], strides = [1, 1]} : vector<8x96xf32> to vector<8x8xf32>
    %247 = arith.truncf %246 : vector<8x8xf32> to vector<8x8xbf16>
    %cst_93 = arith.constant dense<0.000000e+00> : vector<8x8xf32>
    %248 = tpu.matmul %243, %245, %cst_93 {dimension_numbers = #tpu.dot_dimension_numbers<[1], [1], [0], [0], [0, 0, 1, 0], [], []>} : vector<8x8xbf16>, vector<8x8xbf16>, vector<8x8xf32> -> vector<8x8xf32>
    %cst_94 = arith.constant 0.353553385 : f32
    %249 = vector.broadcast %cst_94 : f32 to vector<8x8xf32>
    %250 = arith.mulf %248, %249 : vector<8x8xf32>
    %cst_95 = arith.constant dense<0xFF800000> : vector<8xf32>
    %251 = vector.multi_reduction <maximumf>, %250, %cst_95 [1] : vector<8x8xf32> to vector<8xf32>
    %252 = vector.shape_cast %251 : vector<8xf32> to vector<8x1xf32>
    %253 = vector.broadcast %252 : vector<8x1xf32> to vector<8x8xf32>
    %254 = arith.subf %250, %253 : vector<8x8xf32>
    %255 = math.exp %254 : vector<8x8xf32>
    %cst_96 = arith.constant dense<0.000000e+00> : vector<8xf32>
    %256 = vector.multi_reduction <add>, %255, %cst_96 [1] : vector<8x8xf32> to vector<8xf32>
    %257 = vector.shape_cast %256 : vector<8xf32> to vector<8x1xf32>
    %258 = tpu.reciprocal %257 {approx = true} : vector<8x1xf32> -> vector<8x1xf32>
    %259 = vector.broadcast %258 : vector<8x1xf32> to vector<8x8xf32>
    %260 = arith.mulf %255, %259 : vector<8x8xf32>
    %261 = arith.truncf %260 : vector<8x8xf32> to vector<8x8xbf16>
    %cst_97 = arith.constant dense<0.000000e+00> : vector<8x8xf32>
    %262 = tpu.matmul %261, %247, %cst_97 {dimension_numbers = #tpu.dot_dimension_numbers<[1], [0], [0], [1], [0, 0, 1, 1], [], []>} : vector<8x8xbf16>, vector<8x8xbf16>, vector<8x8xf32> -> vector<8x8xf32>
    %263 = tpu.concatenate %199, %220, %241, %262 in 1 : vector<8x8xf32>, vector<8x8xf32>, vector<8x8xf32>, vector<8x8xf32> -> vector<8x32xf32>
    %264 = arith.truncf %263 : vector<8x32xf32> to vector<8x32xbf16>
    %c1_98 = arith.constant 1 : index
    %c0_99 = arith.constant 0 : index
    %c0_100 = arith.constant 0 : index
    %265 = vector.load %arg4[%c1_98, %c0_99, %c0_100] : memref<2x32x32xbf16, #tpu.memory_space<vmem>>, vector<1x32x32xbf16>
    %266 = vector.shape_cast %265 : vector<1x32x32xbf16> to vector<32x32xbf16>
    %cst_101 = arith.constant dense<0.000000e+00> : vector<8x32xf32>
    %267 = tpu.matmul %264, %266, %cst_101 {dimension_numbers = #tpu.dot_dimension_numbers<[1], [0], [0], [1], [0, 0, 1, 1], [], []>} : vector<8x32xbf16>, vector<32x32xbf16>, vector<8x32xf32> -> vector<8x32xf32>
    %c1_102 = arith.constant 1 : index
    %c0_103 = arith.constant 0 : index
    %c0_104 = arith.constant 0 : index
    %268 = vector.load %arg5[%c1_102, %c0_103, %c0_104] : memref<2x1x32xf32, #tpu.memory_space<vmem>>, vector<1x1x32xf32>
    %269 = vector.shape_cast %268 : vector<1x1x32xf32> to vector<1x32xf32>
    %270 = vector.broadcast %269 : vector<1x32xf32> to vector<8x32xf32>
    %271 = arith.addf %267, %270 : vector<8x32xf32>
    %272 = arith.addf %271, %170 : vector<8x32xf32>
    %c1_105 = arith.constant 1 : index
    %c0_106 = arith.constant 0 : index
    %c0_107 = arith.constant 0 : index
    %273 = vector.load %arg6[%c1_105, %c0_106, %c0_107] : memref<2x1x32xf32, #tpu.memory_space<vmem>>, vector<1x1x32xf32>
    %274 = vector.shape_cast %273 : vector<1x1x32xf32> to vector<1x32xf32>
    %c1_108 = arith.constant 1 : index
    %c0_109 = arith.constant 0 : index
    %c0_110 = arith.constant 0 : index
    %275 = vector.load %arg7[%c1_108, %c0_109, %c0_110] : memref<2x1x32xf32, #tpu.memory_space<vmem>>, vector<1x1x32xf32>
    %276 = vector.shape_cast %275 : vector<1x1x32xf32> to vector<1x32xf32>
    %cst_111 = arith.constant dense<0.000000e+00> : vector<8xf32>
    %277 = vector.multi_reduction <add>, %272, %cst_111 [1] : vector<8x32xf32> to vector<8xf32>
    %278 = vector.shape_cast %277 : vector<8xf32> to vector<8x1xf32>
    %cst_112 = arith.constant 3.200000e+01 : f32
    %279 = vector.broadcast %cst_112 : f32 to vector<8x1xf32>
    %280 = arith.divf %278, %279 : vector<8x1xf32>
    %281 = vector.broadcast %280 : vector<8x1xf32> to vector<8x32xf32>
    %282 = arith.subf %272, %281 : vector<8x32xf32>
    %283 = arith.mulf %282, %282 : vector<8x32xf32>
    %cst_113 = arith.constant dense<0.000000e+00> : vector<8xf32>
    %284 = vector.multi_reduction <add>, %283, %cst_113 [1] : vector<8x32xf32> to vector<8xf32>
    %285 = vector.shape_cast %284 : vector<8xf32> to vector<8x1xf32>
    %cst_114 = arith.constant 3.200000e+01 : f32
    %286 = vector.broadcast %cst_114 : f32 to vector<8x1xf32>
    %287 = arith.divf %285, %286 : vector<8x1xf32>
    %cst_115 = arith.constant 9.99999974E-6 : f32
    %288 = vector.broadcast %cst_115 : f32 to vector<8x1xf32>
    %289 = arith.addf %287, %288 : vector<8x1xf32>
    %290 = math.rsqrt %289 : vector<8x1xf32>
    %291 = vector.broadcast %290 : vector<8x1xf32> to vector<8x32xf32>
    %292 = arith.mulf %282, %291 : vector<8x32xf32>
    %293 = vector.broadcast %274 : vector<1x32xf32> to vector<8x32xf32>
    %294 = arith.mulf %292, %293 : vector<8x32xf32>
    %295 = vector.broadcast %276 : vector<1x32xf32> to vector<8x32xf32>
    %296 = arith.addf %294, %295 : vector<8x32xf32>
    %297 = arith.truncf %296 : vector<8x32xf32> to vector<8x32xbf16>
    %c1_116 = arith.constant 1 : index
    %c0_117 = arith.constant 0 : index
    %c0_118 = arith.constant 0 : index
    %298 = vector.load %arg8[%c1_116, %c0_117, %c0_118] : memref<2x32x64xbf16, #tpu.memory_space<vmem>>, vector<1x32x64xbf16>
    %299 = vector.shape_cast %298 : vector<1x32x64xbf16> to vector<32x64xbf16>
    %cst_119 = arith.constant dense<0.000000e+00> : vector<8x64xf32>
    %300 = tpu.matmul %297, %299, %cst_119 {dimension_numbers = #tpu.dot_dimension_numbers<[1], [0], [0], [1], [0, 0, 1, 1], [], []>} : vector<8x32xbf16>, vector<32x64xbf16>, vector<8x64xf32> -> vector<8x64xf32>
    %c1_120 = arith.constant 1 : index
    %c0_121 = arith.constant 0 : index
    %c0_122 = arith.constant 0 : index
    %301 = vector.load %arg9[%c1_120, %c0_121, %c0_122] : memref<2x1x64xf32, #tpu.memory_space<vmem>>, vector<1x1x64xf32>
    %302 = vector.shape_cast %301 : vector<1x1x64xf32> to vector<1x64xf32>
    %303 = vector.broadcast %302 : vector<1x64xf32> to vector<8x64xf32>
    %304 = arith.addf %300, %303 : vector<8x64xf32>
    %cst_123 = arith.constant 0.000000e+00 : f32
    %305 = vector.broadcast %cst_123 : f32 to vector<8x64xf32>
    %306 = arith.maximumf %304, %305 : vector<8x64xf32>
    %307 = arith.truncf %306 : vector<8x64xf32> to vector<8x64xbf16>
    %c1_124 = arith.constant 1 : index
    %c0_125 = arith.constant 0 : index
    %c0_126 = arith.constant 0 : index
    %308 = vector.load %arg10[%c1_124, %c0_125, %c0_126] : memref<2x64x32xbf16, #tpu.memory_space<vmem>>, vector<1x64x32xbf16>
    %309 = vector.shape_cast %308 : vector<1x64x32xbf16> to vector<64x32xbf16>
    %cst_127 = arith.constant dense<0.000000e+00> : vector<8x32xf32>
    %310 = tpu.matmul %307, %309, %cst_127 {dimension_numbers = #tpu.dot_dimension_numbers<[1], [0], [0], [1], [0, 0, 1, 1], [], []>} : vector<8x64xbf16>, vector<64x32xbf16>, vector<8x32xf32> -> vector<8x32xf32>
    %c1_128 = arith.constant 1 : index
    %c0_129 = arith.constant 0 : index
    %c0_130 = arith.constant 0 : index
    %311 = vector.load %arg11[%c1_128, %c0_129, %c0_130] : memref<2x1x32xf32, #tpu.memory_space<vmem>>, vector<1x1x32xf32>
    %312 = vector.shape_cast %311 : vector<1x1x32xf32> to vector<1x32xf32>
    %313 = vector.broadcast %312 : vector<1x32xf32> to vector<8x32xf32>
    %314 = arith.addf %310, %313 : vector<8x32xf32>
    %315 = arith.addf %314, %296 : vector<8x32xf32>
    %c1_131 = arith.constant 1 : index
    %c0_132 = arith.constant 0 : index
    %c0_133 = arith.constant 0 : index
    %316 = vector.load %arg12[%c1_131, %c0_132, %c0_133] : memref<2x1x32xf32, #tpu.memory_space<vmem>>, vector<1x1x32xf32>
    %317 = vector.shape_cast %316 : vector<1x1x32xf32> to vector<1x32xf32>
    %c1_134 = arith.constant 1 : index
    %c0_135 = arith.constant 0 : index
    %c0_136 = arith.constant 0 : index
    %318 = vector.load %arg13[%c1_134, %c0_135, %c0_136] : memref<2x1x32xf32, #tpu.memory_space<vmem>>, vector<1x1x32xf32>
    %319 = vector.shape_cast %318 : vector<1x1x32xf32> to vector<1x32xf32>
    %cst_137 = arith.constant dense<0.000000e+00> : vector<8xf32>
    %320 = vector.multi_reduction <add>, %315, %cst_137 [1] : vector<8x32xf32> to vector<8xf32>
    %321 = vector.shape_cast %320 : vector<8xf32> to vector<8x1xf32>
    %cst_138 = arith.constant 3.200000e+01 : f32
    %322 = vector.broadcast %cst_138 : f32 to vector<8x1xf32>
    %323 = arith.divf %321, %322 : vector<8x1xf32>
    %324 = vector.broadcast %323 : vector<8x1xf32> to vector<8x32xf32>
    %325 = arith.subf %315, %324 : vector<8x32xf32>
    %326 = arith.mulf %325, %325 : vector<8x32xf32>
    %cst_139 = arith.constant dense<0.000000e+00> : vector<8xf32>
    %327 = vector.multi_reduction <add>, %326, %cst_139 [1] : vector<8x32xf32> to vector<8xf32>
    %328 = vector.shape_cast %327 : vector<8xf32> to vector<8x1xf32>
    %cst_140 = arith.constant 3.200000e+01 : f32
    %329 = vector.broadcast %cst_140 : f32 to vector<8x1xf32>
    %330 = arith.divf %328, %329 : vector<8x1xf32>
    %cst_141 = arith.constant 9.99999974E-6 : f32
    %331 = vector.broadcast %cst_141 : f32 to vector<8x1xf32>
    %332 = arith.addf %330, %331 : vector<8x1xf32>
    %333 = math.rsqrt %332 : vector<8x1xf32>
    %334 = vector.broadcast %333 : vector<8x1xf32> to vector<8x32xf32>
    %335 = arith.mulf %325, %334 : vector<8x32xf32>
    %336 = vector.broadcast %317 : vector<1x32xf32> to vector<8x32xf32>
    %337 = arith.mulf %335, %336 : vector<8x32xf32>
    %338 = vector.broadcast %319 : vector<1x32xf32> to vector<8x32xf32>
    %339 = arith.addf %337, %338 : vector<8x32xf32>
    %340 = arith.truncf %339 : vector<8x32xf32> to vector<8x32xbf16>
    %c0_142 = arith.constant 0 : index
    %c0_143 = arith.constant 0 : index
    %341 = vector.load %arg14[%c0_142, %c0_143] : memref<32x128xbf16, #tpu.memory_space<vmem>>, vector<32x128xbf16>
    %cst_144 = arith.constant dense<0.000000e+00> : vector<8x128xf32>
    %342 = tpu.matmul %340, %341, %cst_144 {dimension_numbers = #tpu.dot_dimension_numbers<[1], [0], [0], [1], [0, 0, 1, 1], [], []>} : vector<8x32xbf16>, vector<32x128xbf16>, vector<8x128xf32> -> vector<8x128xf32>
    %c0_145 = arith.constant 0 : index
    %c0_146 = arith.constant 0 : index
    %343 = vector.load %arg15[%c0_145, %c0_146] : memref<1x128xf32, #tpu.memory_space<vmem>>, vector<1x128xf32>
    %344 = vector.broadcast %343 : vector<1x128xf32> to vector<8x128xf32>
    %345 = arith.addf %342, %344 : vector<8x128xf32>
    %c0_147 = arith.constant 0 : index
    %c0_148 = arith.constant 0 : index
    %c0_149 = arith.constant 0 : index
    %346 = vector.load %arg16[%c0_147, %c0_148, %c0_149] : memref<1x8x128xf32, #tpu.memory_space<vmem>>, vector<1x8x128xf32>
    %347 = vector.shape_cast %346 : vector<1x8x128xf32> to vector<8x128xf32>
    %348 = vector.shape_cast %345 : vector<8x128xf32> to vector<1x8x128xf32>
    tpu.vector_store %arg16[%c0_147, %c0_148, %c0_149], %348 {strides = array<i32>} : memref<1x8x128xf32, #tpu.memory_space<vmem>>, vector<1x8x128xf32>,
    return
  }
  func.func @transform_0(%arg0: i32) -> (i32, i32, i32) {
    %c0_i32 = arith.constant 0 : i32
    %c0_i32_0 = arith.constant 0 : i32
    %c0_i32_1 = arith.constant 0 : i32
    return %arg0, %c0_i32, %c0_i32_0 : i32, i32, i32
  }
  func.func @transform_1(%arg0: i32) -> (i32, i32, i32) {
    %c0_i32 = arith.constant 0 : i32
    %c0_i32_0 = arith.constant 0 : i32
    %c0_i32_1 = arith.constant 0 : i32
    %c0_i32_2 = arith.constant 0 : i32
    return %c0_i32, %c0_i32_0, %c0_i32_1 : i32, i32, i32
  }
  func.func @transform_2(%arg0: i32) -> (i32, i32, i32) {
    %c0_i32 = arith.constant 0 : i32
    %c0_i32_0 = arith.constant 0 : i32
    %c0_i32_1 = arith.constant 0 : i32
    %c0_i32_2 = arith.constant 0 : i32
    return %c0_i32, %c0_i32_0, %c0_i32_1 : i32, i32, i32
  }
  func.func @transform_3(%arg0: i32) -> (i32, i32, i32) {
    %c0_i32 = arith.constant 0 : i32
    %c0_i32_0 = arith.constant 0 : i32
    %c0_i32_1 = arith.constant 0 : i32
    %c0_i32_2 = arith.constant 0 : i32
    return %c0_i32, %c0_i32_0, %c0_i32_1 : i32, i32, i32
  }
  func.func @transform_4(%arg0: i32) -> (i32, i32, i32) {
    %c0_i32 = arith.constant 0 : i32
    %c0_i32_0 = arith.constant 0 : i32
    %c0_i32_1 = arith.constant 0 : i32
    %c0_i32_2 = arith.constant 0 : i32
    return %c0_i32, %c0_i32_0, %c0_i32_1 : i32, i32, i32
  }
  func.func @transform_5(%arg0: i32) -> (i32, i32, i32) {
    %c0_i32 = arith.constant 0 : i32
    %c0_i32_0 = arith.constant 0 : i32
    %c0_i32_1 = arith.constant 0 : i32
    %c0_i32_2 = arith.constant 0 : i32
    return %c0_i32, %c0_i32_0, %c0_i32_1 : i32, i32, i32
  }
  func.func @transform_6(%arg0: i32) -> (i32, i32, i32) {
    %c0_i32 = arith.constant 0 : i32
    %c0_i32_0 = arith.constant 0 : i32
    %c0_i32_1 = arith.constant 0 : i32
    %c0_i32_2 = arith.constant 0 : i32
    return %c0_i32, %c0_i32_0, %c0_i32_1 : i32, i32, i32
  }
  func.func @transform_7(%arg0: i32) -> (i32, i32, i32) {
    %c0_i32 = arith.constant 0 : i32
    %c0_i32_0 = arith.constant 0 : i32
    %c0_i32_1 = arith.constant 0 : i32
    %c0_i32_2 = arith.constant 0 : i32
    return %c0_i32, %c0_i32_0, %c0_i32_1 : i32, i32, i32
  }
  func.func @transform_8(%arg0: i32) -> (i32, i32, i32) {
    %c0_i32 = arith.constant 0 : i32
    %c0_i32_0 = arith.constant 0 : i32
    %c0_i32_1 = arith.constant 0 : i32
    %c0_i32_2 = arith.constant 0 : i32
    return %c0_i32, %c0_i32_0, %c0_i32_1 : i32, i32, i32
  }
  func.func @transform_9(%arg0: i32) -> (i32, i32, i32) {
    %c0_i32 = arith.constant 0 : i32
    %c0_i32_0 = arith.constant 0 : i32
    %c0_i32_1 = arith.constant 0 : i32
    %c0_i32_2 = arith.constant 0 : i32
    return %c0_i32, %c0_i32_0, %c0_i32_1 : i32, i32, i32
  }
  func.func @transform_10(%arg0: i32) -> (i32, i32, i32) {
    %c0_i32 = arith.constant 0 : i32
    %c0_i32_0 = arith.constant 0 : i32
    %c0_i32_1 = arith.constant 0 : i32
    %c0_i32_2 = arith.constant 0 : i32
    return %c0_i32, %c0_i32_0, %c0_i32_1 : i32, i32, i32
  }
  func.func @transform_11(%arg0: i32) -> (i32, i32, i32) {
    %c0_i32 = arith.constant 0 : i32
    %c0_i32_0 = arith.constant 0 : i32
    %c0_i32_1 = arith.constant 0 : i32
    %c0_i32_2 = arith.constant 0 : i32
    return %c0_i32, %c0_i32_0, %c0_i32_1 : i32, i32, i32
  }
  func.func @transform_12(%arg0: i32) -> (i32, i32, i32) {
    %c0_i32 = arith.constant 0 : i32
    %c0_i32_0 = arith.constant 0 : i32
    %c0_i32_1 = arith.constant 0 : i32
    %c0_i32_2 = arith.constant 0 : i32
    return %c0_i32, %c0_i32_0, %c0_i32_1 : i32, i32, i32
  }
  func.func @transform_13(%arg0: i32) -> (i32, i32) {
    %c0_i32 = arith.constant 0 : i32
    %c0_i32_0 = arith.constant 0 : i32
    %c0_i32_1 = arith.constant 0 : i32
    return %c0_i32, %c0_i32_0 : i32, i32
  }
  func.func @transform_14(%arg0: i32) -> (i32, i32) {
    %c0_i32 = arith.constant 0 : i32
    %c0_i32_0 = arith.constant 0 : i32
    %c0_i32_1 = arith.constant 0 : i32
    return %c0_i32, %c0_i32_0 : i32, i32
  }
  func.func @transform_15(%arg0: i32) -> (i32, i32, i32) {
    %c0_i32 = arith.constant 0 : i32
    %c0_i32_0 = arith.constant 0 : i32
    %c0_i32_1 = arith.constant 0 : i32
    return %arg0, %c0_i32, %c0_i32_0 : i32, i32, i32
  }
}

</mosaic_0001>

<llo_original>
// kernel: div.5
$region0: #{div.5}
  %s0 = inlined_call_operand.vmem [shape: f32[2,8], index: 0, kind: input, shape index: {}]
  %s1 = inlined_call_operand.vmem [shape: f32[16], index: 1, kind: output, shape index: {}]
  $region1: #{div.5} parent=0
    #allocation0 [shape = 'u8[4096]{0}', space=vmem, size = 0x1000, scoped, tag = 'scoped mem for output reshape']
    #allocation1 [shape = 'u8[4096]{0}', space=vmem, size = 0x1000, scoped, tag = 'scoped mem for input reshape']
    %s3 = ssub.s32 4, 1
    %v4 = vld [vmem:[%s0] sm:%s3]
    %5 = vst [vmem:[#allocation1] sm:%s3] %v4
    %v6 = vld [vmem:[#allocation1] sm:$0x1]
    %vm7 = vcmask 64512
    %8 = vst.msk [vmem:[#allocation0] sm:$0x1] %vm7, %v6
    %s9 = scalar_lea.vmem [#allocation1], 1
    %v10 = vld [vmem:[%s9] sm:$0x1]
    %11 = vrot.lane.b32.xlu0 %v10, 8
    %v12 = vpop.permute.xlu0 %11
    %vm13 = vcmask 130112
    %14 = vst.msk [vmem:[#allocation0] sm:$0x1] %vm13, %v12
    %s16 = ssub.s32 2, 1
    %v17 = vld [vmem:[#allocation0] sm:%s16]
    %s19 = ssub.s32 2, 1
    %20 = vst [vmem:[%s1] sm:%s19] %v17

// kernel: seq_encoder_only_forward.1
$region0: #{seq_encoder_only_forward.1}
  #allocation0 [shape = 'u32[]', space=smem, size = 0x4, offset = 0x4, fixed_abs, tag = 'smem constant byte address 0x4 - core index']
  #allocation1 [shape = 'u32[72,128]{1,0:T(1,128)}', space=vmem, size = 0x9000, scoped, tag = 'internal scratch']
  %s0 = inlined_call_operand.vmem [shape: f32[2,8,32], index: 0, kind: input, shape index: {}]
  %s1 = inlined_call_operand.vmem [shape: bf16[2,32,96], index: 1, kind: input, shape index: {}]
  %s2 = inlined_call_operand.vmem [shape: f32[2,1,96], index: 2, kind: input, shape index: {}]
  %s3 = inlined_call_operand.vmem [shape: bf16[2,32,32], index: 3, kind: input, shape index: {}]
  %s4 = inlined_call_operand.vmem [shape: f32[2,1,32], index: 4, kind: input, shape index: {}]
  %s5 = inlined_call_operand.vmem [shape: f32[2,1,32], index: 5, kind: input, shape index: {}]
  %s6 = inlined_call_operand.vmem [shape: f32[2,1,32], index: 6, kind: input, shape index: {}]
  %s7 = inlined_call_operand.vmem [shape: bf16[2,32,64], index: 7, kind: input, shape index: {}]
  %s8 = inlined_call_operand.vmem [shape: f32[2,1,64], index: 8, kind: input, shape index: {}]
  %s9 = inlined_call_operand.vmem [shape: bf16[2,64,32], index: 9, kind: input, shape index: {}]
  %s10 = inlined_call_operand.vmem [shape: f32[2,1,32], index: 10, kind: input, shape index: {}]
  %s11 = inlined_call_operand.vmem [shape: f32[2,1,32], index: 11, kind: input, shape index: {}]
  %s12 = inlined_call_operand.vmem [shape: f32[2,1,32], index: 12, kind: input, shape index: {}]
  %s13 = inlined_call_operand.vmem [shape: bf16[32,128], index: 13, kind: input, shape index: {}]
  %s14 = inlined_call_operand.vmem [shape: f32[1,128], index: 14, kind: input, shape index: {}]
  %s15 = inlined_call_operand.vmem [shape: f32[2,8,128], index: 15, kind: output, shape index: {}]
  %s16 = sld [smem:[#allocation0]]
  $region93: #{seq_encoder_only_forward.1} parent=0
    _
  %s18 = ssub.s32 1, %s16
  %s19 = scalar_select 0, %s18, %s16
  loop: start=0, step=1, limit=4
  $region2: #{seq_encoder_only_forward.1} parent=0 // loop_pre_header
    _
  $region3: #{seq_encoder_only_forward.1} parent=0 // loop_header
    %s21 = sphi 0, %s25
    %p22 = scmp.ge.s32.totalorder %s21, 4
    %s31 = sphi 0, %s33
    %s34 = sphi 0, %s31
    %s35 = sphi 0, %s34
    %s51 = sphi 0, %s35
    %s55 = sphi 0, %s55
    %s57 = sphi 0, %s55
    %s58 = sphi 0, %s57
    %s72 = sphi 0, %s58
    %s76 = sphi 0, %s76
    %s78 = sphi 0, %s76
    %s79 = sphi 0, %s78
    %s93 = sphi 0, %s79
    %s97 = sphi 0, %s97
    %s99 = sphi 0, %s97
    %s100 = sphi 0, %s99
    %s114 = sphi 0, %s100
    %s118 = sphi 0, %s118
    %s120 = sphi 0, %s118
    %s121 = sphi 0, %s120
    %s135 = sphi 0, %s121
    %s139 = sphi 0, %s139
    %s141 = sphi 0, %s139
    %s142 = sphi 0, %s141
    %s156 = sphi 0, %s142
    %s160 = sphi 0, %s160
    %s162 = sphi 0, %s160
    %s163 = sphi 0, %s162
    %s177 = sphi 0, %s163
    %s181 = sphi 0, %s181
    %s183 = sphi 0, %s181
    %s184 = sphi 0, %s183
    %s198 = sphi 0, %s184
    %s202 = sphi 0, %s202
    %s204 = sphi 0, %s202
    %s205 = sphi 0, %s204
    %s219 = sphi 0, %s205
    %s223 = sphi 0, %s223
    %s225 = sphi 0, %s223
    %s226 = sphi 0, %s225
    %s240 = sphi 0, %s226
    %s244 = sphi 0, %s244
    %s246 = sphi 0, %s244
    %s247 = sphi 0, %s246
    %s261 = sphi 0, %s247
    %s265 = sphi 0, %s265
    %s267 = sphi 0, %s265
    %s268 = sphi 0, %s267
    %s282 = sphi 0, %s268
    %s286 = sphi 0, %s286
    %s288 = sphi 0, %s286
    %s289 = sphi 0, %s288
    %s303 = sphi 0, %s289
    %s307 = sphi 0, %s307
    %s309 = sphi 0, %s307
    %s310 = sphi 0, %s309
    %s324 = sphi 0, %s310
    %s328 = sphi 0, %s328
    %s330 = sphi 0, %s328
    %s331 = sphi 0, %s330
    %s345 = sphi 0, %s331
    %s351 = sphi 0, %s353
    %s354 = sphi 0, %s351
    %s355 = sphi 0, %s354
    %s371 = sphi 0, %s355
  $region4: #{seq_encoder_only_forward.1} parent=0 // loop_header_branch
    %24 = sbr.rel (%p22) target = $region8
  $region5: #{seq_encoder_only_forward.1} parent=0 // loop_body
    %s26 = ssub.s32 %s21, 1
    %s27 = ssub.s32 %s21, 2
    %s28 = sadd.s32 %s21, 1
    %s29 = ssub.s32 %s21, %s28
    %p30 = scmp.eq.s32.totalorder %s29, 0
    %s32 = sadd.s32 %s31, 1
    %s33 = scalar_select %p30, %s31, %s32
    %p36 = pneg %p30
    %p37 = scmp.eq.s32.totalorder %s21, 1
    %p38 = por %p36, %p37
    %p39 = scmp.ne.s32.totalorder %s31, %s34
    %p40 = scmp.eq.s32.totalorder %s21, 0
    %p41 = por %p39, %p40
    %p42 = scmp.ne.s32.totalorder %s31, %s34
    %p43 = scmp.eq.s32.totalorder %s26, 1
    %p44 = por %p42, %p43
    %p45 = scmp.ne.s32.totalorder %s34, %s35
    %p46 = scmp.eq.s32.totalorder %s26, 0
    %p47 = por %p45, %p46
    %p48 = scmp.ne.s32.totalorder %s34, %s35
    %p49 = scmp.eq.s32.totalorder %s27, 1
    %p50 = por %p48, %p49
    %p52 = scmp.ne.s32.totalorder %s35, %s51
    %p53 = scmp.eq.s32.totalorder %s27, 0
    %p54 = por %p52, %p53
    %s56 = sadd.s32 %s55, 1
    %p59 = scmp.eq.s32.totalorder %s21, 1
    %p60 = scmp.ne.s32.totalorder %s55, %s57
    %p61 = scmp.eq.s32.totalorder %s21, 0
    %p62 = por %p60, %p61
    %p63 = scmp.ne.s32.totalorder %s55, %s57
    %p64 = scmp.eq.s32.totalorder %s26, 1
    %p65 = por %p63, %p64
    %p66 = scmp.ne.s32.totalorder %s57, %s58
    %p67 = scmp.eq.s32.totalorder %s26, 0
    %p68 = por %p66, %p67
    %p69 = scmp.ne.s32.totalorder %s57, %s58
    %p70 = scmp.eq.s32.totalorder %s27, 1
    %p71 = por %p69, %p70
    %p73 = scmp.ne.s32.totalorder %s58, %s72
    %p74 = scmp.eq.s32.totalorder %s27, 0
    %p75 = por %p73, %p74
    %s77 = sadd.s32 %s76, 1
    %p80 = scmp.eq.s32.totalorder %s21, 1
    %p81 = scmp.ne.s32.totalorder %s76, %s78
    %p82 = scmp.eq.s32.totalorder %s21, 0
    %p83 = por %p81, %p82
    %p84 = scmp.ne.s32.totalorder %s76, %s78
    %p85 = scmp.eq.s32.totalorder %s26, 1
    %p86 = por %p84, %p85
    %p87 = scmp.ne.s32.totalorder %s78, %s79
    %p88 = scmp.eq.s32.totalorder %s26, 0
    %p89 = por %p87, %p88
    %p90 = scmp.ne.s32.totalorder %s78, %s79
    %p91 = scmp.eq.s32.totalorder %s27, 1
    %p92 = por %p90, %p91
    %p94 = scmp.ne.s32.totalorder %s79, %s93
    %p95 = scmp.eq.s32.totalorder %s27, 0
    %p96 = por %p94, %p95
    %s98 = sadd.s32 %s97, 1
    %p101 = scmp.eq.s32.totalorder %s21, 1
    %p102 = scmp.ne.s32.totalorder %s97, %s99
    %p103 = scmp.eq.s32.totalorder %s21, 0
    %p104 = por %p102, %p103
    %p105 = scmp.ne.s32.totalorder %s97, %s99
    %p106 = scmp.eq.s32.totalorder %s26, 1
    %p107 = por %p105, %p106
    %p108 = scmp.ne.s32.totalorder %s99, %s100
    %p109 = scmp.eq.s32.totalorder %s26, 0
    %p110 = por %p108, %p109
    %p111 = scmp.ne.s32.totalorder %s99, %s100
    %p112 = scmp.eq.s32.totalorder %s27, 1
    %p113 = por %p111, %p112
    %p115 = scmp.ne.s32.totalorder %s100, %s114
    %p116 = scmp.eq.s32.totalorder %s27, 0
    %p117 = por %p115, %p116
    %s119 = sadd.s32 %s118, 1
    %p122 = scmp.eq.s32.totalorder %s21, 1
    %p123 = scmp.ne.s32.totalorder %s118, %s120
    %p124 = scmp.eq.s32.totalorder %s21, 0
    %p125 = por %p123, %p124
    %p126 = scmp.ne.s32.totalorder %s118, %s120
    %p127 = scmp.eq.s32.totalorder %s26, 1
    %p128 = por %p126, %p127
    %p129 = scmp.ne.s32.totalorder %s120, %s121
    %p130 = scmp.eq.s32.totalorder %s26, 0
    %p131 = por %p129, %p130
    %p132 = scmp.ne.s32.totalorder %s120, %s121
    %p133 = scmp.eq.s32.totalorder %s27, 1
    %p134 = por %p132, %p133
    %p136 = scmp.ne.s32.totalorder %s121, %s135
    %p137 = scmp.eq.s32.totalorder %s27, 0
    %p138 = por %p136, %p137
    %s140 = sadd.s32 %s139, 1
    %p143 = scmp.eq.s32.totalorder %s21, 1
    %p144 = scmp.ne.s32.totalorder %s139, %s141
    %p145 = scmp.eq.s32.totalorder %s21, 0
    %p146 = por %p144, %p145
    %p147 = scmp.ne.s32.totalorder %s139, %s141
    %p148 = scmp.eq.s32.totalorder %s26, 1
    %p149 = por %p147, %p148
    %p150 = scmp.ne.s32.totalorder %s141, %s142
    %p151 = scmp.eq.s32.totalorder %s26, 0
    %p152 = por %p150, %p151
    %p153 = scmp.ne.s32.totalorder %s141, %s142
    %p154 = scmp.eq.s32.totalorder %s27, 1
    %p155 = por %p153, %p154
    %p157 = scmp.ne.s32.totalorder %s142, %s156
    %p158 = scmp.eq.s32.totalorder %s27, 0
    %p159 = por %p157, %p158
    %s161 = sadd.s32 %s160, 1
    %p164 = scmp.eq.s32.totalorder %s21, 1
    %p165 = scmp.ne.s32.totalorder %s160, %s162
    %p166 = scmp.eq.s32.totalorder %s21, 0
    %p167 = por %p165, %p166
    %p168 = scmp.ne.s32.totalorder %s160, %s162
    %p169 = scmp.eq.s32.totalorder %s26, 1
    %p170 = por %p168, %p169
    %p171 = scmp.ne.s32.totalorder %s162, %s163
    %p172 = scmp.eq.s32.totalorder %s26, 0
    %p173 = por %p171, %p172
    %p174 = scmp.ne.s32.totalorder %s162, %s163
    %p175 = scmp.eq.s32.totalorder %s27, 1
    %p176 = por %p174, %p175
    %p178 = scmp.ne.s32.totalorder %s163, %s177
    %p179 = scmp.eq.s32.totalorder %s27, 0
    %p180 = por %p178, %p179
    %s182 = sadd.s32 %s181, 1
    %p185 = scmp.eq.s32.totalorder %s21, 1
    %p186 = scmp.ne.s32.totalorder %s181, %s183
    %p187 = scmp.eq.s32.totalorder %s21, 0
    %p188 = por %p186, %p187
    %p189 = scmp.ne.s32.totalorder %s181, %s183
    %p190 = scmp.eq.s32.totalorder %s26, 1
    %p191 = por %p189, %p190
    %p192 = scmp.ne.s32.totalorder %s183, %s184
    %p193 = scmp.eq.s32.totalorder %s26, 0
    %p194 = por %p192, %p193
    %p195 = scmp.ne.s32.totalorder %s183, %s184
    %p196 = scmp.eq.s32.totalorder %s27, 1
    %p197 = por %p195, %p196
    %p199 = scmp.ne.s32.totalorder %s184, %s198
    %p200 = scmp.eq.s32.totalorder %s27, 0
    %p201 = por %p199, %p200
    %s203 = sadd.s32 %s202, 1
    %p206 = scmp.eq.s32.totalorder %s21, 1
    %p207 = scmp.ne.s32.totalorder %s202, %s204
    %p208 = scmp.eq.s32.totalorder %s21, 0
    %p209 = por %p207, %p208
    %p210 = scmp.ne.s32.totalorder %s202, %s204
    %p211 = scmp.eq.s32.totalorder %s26, 1
    %p212 = por %p210, %p211
    %p213 = scmp.ne.s32.totalorder %s204, %s205
    %p214 = scmp.eq.s32.totalorder %s26, 0
    %p215 = por %p213, %p214
    %p216 = scmp.ne.s32.totalorder %s204, %s205
    %p217 = scmp.eq.s32.totalorder %s27, 1
    %p218 = por %p216, %p217
    %p220 = scmp.ne.s32.totalorder %s205, %s219
    %p221 = scmp.eq.s32.totalorder %s27, 0
    %p222 = por %p220, %p221
    %s224 = sadd.s32 %s223, 1
    %p227 = scmp.eq.s32.totalorder %s21, 1
    %p228 = scmp.ne.s32.totalorder %s223, %s225
    %p229 = scmp.eq.s32.totalorder %s21, 0
    %p230 = por %p228, %p229
    %p231 = scmp.ne.s32.totalorder %s223, %s225
    %p232 = scmp.eq.s32.totalorder %s26, 1
    %p233 = por %p231, %p232
    %p234 = scmp.ne.s32.totalorder %s225, %s226
    %p235 = scmp.eq.s32.totalorder %s26, 0
    %p236 = por %p234, %p235
    %p237 = scmp.ne.s32.totalorder %s225, %s226
    %p238 = scmp.eq.s32.totalorder %s27, 1
    %p239 = por %p237, %p238
    %p241 = scmp.ne.s32.totalorder %s226, %s240
    %p242 = scmp.eq.s32.totalorder %s27, 0
    %p243 = por %p241, %p242
    %s245 = sadd.s32 %s244, 1
    %p248 = scmp.eq.s32.totalorder %s21, 1
    %p249 = scmp.ne.s32.totalorder %s244, %s246
    %p250 = scmp.eq.s32.totalorder %s21, 0
    %p251 = por %p249, %p250
    %p252 = scmp.ne.s32.totalorder %s244, %s246
    %p253 = scmp.eq.s32.totalorder %s26, 1
    %p254 = por %p252, %p253
    %p255 = scmp.ne.s32.totalorder %s246, %s247
    %p256 = scmp.eq.s32.totalorder %s26, 0
    %p257 = por %p255, %p256
    %p258 = scmp.ne.s32.totalorder %s246, %s247
    %p259 = scmp.eq.s32.totalorder %s27, 1
    %p260 = por %p258, %p259
    %p262 = scmp.ne.s32.totalorder %s247, %s261
    %p263 = scmp.eq.s32.totalorder %s27, 0
    %p264 = por %p262, %p263
    %s266 = sadd.s32 %s265, 1
    %p269 = scmp.eq.s32.totalorder %s21, 1
    %p270 = scmp.ne.s32.totalorder %s265, %s267
    %p271 = scmp.eq.s32.totalorder %s21, 0
    %p272 = por %p270, %p271
    %p273 = scmp.ne.s32.totalorder %s265, %s267
    %p274 = scmp.eq.s32.totalorder %s26, 1
    %p275 = por %p273, %p274
    %p276 = scmp.ne.s32.totalorder %s267, %s268
    %p277 = scmp.eq.s32.totalorder %s26, 0
    %p278 = por %p276, %p277
    %p279 = scmp.ne.s32.totalorder %s267, %s268
    %p280 = scmp.eq.s32.totalorder %s27, 1
    %p281 = por %p279, %p280
    %p283 = scmp.ne.s32.totalorder %s268, %s282
    %p284 = scmp.eq.s32.totalorder %s27, 0
    %p285 = por %p283, %p284
    %s287 = sadd.s32 %s286, 1
    %p290 = scmp.eq.s32.totalorder %s21, 1
    %p291 = scmp.ne.s32.totalorder %s286, %s288
    %p292 = scmp.eq.s32.totalorder %s21, 0
    %p293 = por %p291, %p292
    %p294 = scmp.ne.s32.totalorder %s286, %s288
    %p295 = scmp.eq.s32.totalorder %s26, 1
    %p296 = por %p294, %p295
    %p297 = scmp.ne.s32.totalorder %s288, %s289
    %p298 = scmp.eq.s32.totalorder %s26, 0
    %p299 = por %p297, %p298
    %p300 = scmp.ne.s32.totalorder %s288, %s289
    %p301 = scmp.eq.s32.totalorder %s27, 1
    %p302 = por %p300, %p301
    %p304 = scmp.ne.s32.totalorder %s289, %s303
    %p305 = scmp.eq.s32.totalorder %s27, 0
    %p306 = por %p304, %p305
    %s308 = sadd.s32 %s307, 1
    %p311 = scmp.eq.s32.totalorder %s21, 1
    %p312 = scmp.ne.s32.totalorder %s307, %s309
    %p313 = scmp.eq.s32.totalorder %s21, 0
    %p314 = por %p312, %p313
    %p315 = scmp.ne.s32.totalorder %s307, %s309
    %p316 = scmp.eq.s32.totalorder %s26, 1
    %p317 = por %p315, %p316
    %p318 = scmp.ne.s32.totalorder %s309, %s310
    %p319 = scmp.eq.s32.totalorder %s26, 0
    %p320 = por %p318, %p319
    %p321 = scmp.ne.s32.totalorder %s309, %s310
    %p322 = scmp.eq.s32.totalorder %s27, 1
    %p323 = por %p321, %p322
    %p325 = scmp.ne.s32.totalorder %s310, %s324
    %p326 = scmp.eq.s32.totalorder %s27, 0
    %p327 = por %p325, %p326
    %s329 = sadd.s32 %s328, 1
    %p332 = scmp.eq.s32.totalorder %s21, 1
    %p333 = scmp.ne.s32.totalorder %s328, %s330
    %p334 = scmp.eq.s32.totalorder %s21, 0
    %p335 = por %p333, %p334
    %p336 = scmp.ne.s32.totalorder %s328, %s330
    %p337 = scmp.eq.s32.totalorder %s26, 1
    %p338 = por %p336, %p337
    %p339 = scmp.ne.s32.totalorder %s330, %s331
    %p340 = scmp.eq.s32.totalorder %s26, 0
    %p341 = por %p339, %p340
    %p342 = scmp.ne.s32.totalorder %s330, %s331
    %p343 = scmp.eq.s32.totalorder %s27, 1
    %p344 = por %p342, %p343
    %p346 = scmp.ne.s32.totalorder %s331, %s345
    %p347 = scmp.eq.s32.totalorder %s27, 0
    %p348 = por %p346, %p347
    %s349 = ssub.s32 %s21, %s28
    %p350 = scmp.eq.s32.totalorder %s349, 0
    %s352 = sadd.s32 %s351, 1
    %s353 = scalar_select %p350, %s351, %s352
    %p356 = pneg %p350
    %p357 = scmp.eq.s32.totalorder %s21, 1
    %p358 = por %p356, %p357
    %p359 = scmp.ne.s32.totalorder %s351, %s354
    %p360 = scmp.eq.s32.totalorder %s21, 0
    %p361 = por %p359, %p360
    %p362 = scmp.ne.s32.totalorder %s351, %s354
    %p363 = scmp.eq.s32.totalorder %s26, 1
    %p364 = por %p362, %p363
    %p365 = scmp.ne.s32.totalorder %s354, %s355
    %p366 = scmp.eq.s32.totalorder %s26, 0
    %p367 = por %p365, %p366
    %p368 = scmp.ne.s32.totalorder %s354, %s355
    %p369 = scmp.eq.s32.totalorder %s27, 1
    %p370 = por %p368, %p369
    %p372 = scmp.ne.s32.totalorder %s355, %s371
    %p373 = scmp.eq.s32.totalorder %s27, 0
    %p374 = por %p372, %p373
    %p375 = scmp.le.s32.totalorder 1, %s21
    %p376 = scmp.lt.s32.totalorder %s21, 3
    %p377 = pnand %p375, %p376
    %p378 = pneg %p377
    // Predicated region
    $region9: #{seq_encoder_only_forward.1} parent=5 // pred_check
      _
    $region10: #{seq_encoder_only_forward.1} parent=5 // pred_check_branch
      %380 = sbr.rel (%p377) target = $region12
    $region11: #{seq_encoder_only_forward.1} parent=5 // pred_region
      %s381 = ssub.s32 %s21, 1
      // Predicated region
      $region13: #{seq_encoder_only_forward.1} parent=11 // pred_check
        %p382 = pneg %p68
      $region14: #{seq_encoder_only_forward.1} parent=11 // pred_check_branch
        %384 = sbr.rel (%p382) target = $region16
      $region15: #{seq_encoder_only_forward.1} parent=11 // pred_region
        _
      $region16: #{seq_encoder_only_forward.1} parent=11 // pred_fallthru
        _
      // Predicated region
      $region17: #{seq_encoder_only_forward.1} parent=11 // pred_check
        %p385 = pneg %p89
      $region18: #{seq_encoder_only_forward.1} parent=11 // pred_check_branch
        %387 = sbr.rel (%p385) target = $region20
      $region19: #{seq_encoder_only_forward.1} parent=11 // pred_region
        _
      $region20: #{seq_encoder_only_forward.1} parent=11 // pred_fallthru
        _
      // Predicated region
      $region21: #{seq_encoder_only_forward.1} parent=11 // pred_check
        %p388 = pneg %p110
      $region22: #{seq_encoder_only_forward.1} parent=11 // pred_check_branch
        %390 = sbr.rel (%p388) target = $region24
      $region23: #{seq_encoder_only_forward.1} parent=11 // pred_region
        _
      $region24: #{seq_encoder_only_forward.1} parent=11 // pred_fallthru
        _
      // Predicated region
      $region25: #{seq_encoder_only_forward.1} parent=11 // pred_check
        %p391 = pneg %p131
      $region26: #{seq_encoder_only_forward.1} parent=11 // pred_check_branch
        %393 = sbr.rel (%p391) target = $region28
      $region27: #{seq_encoder_only_forward.1} parent=11 // pred_region
        _
      $region28: #{seq_encoder_only_forward.1} parent=11 // pred_fallthru
        _
      // Predicated region
      $region29: #{seq_encoder_only_forward.1} parent=11 // pred_check
        %p394 = pneg %p152
      $region30: #{seq_encoder_only_forward.1} parent=11 // pred_check_branch
        %396 = sbr.rel (%p394) target = $region32
      $region31: #{seq_encoder_only_forward.1} parent=11 // pred_region
        _
      $region32: #{seq_encoder_only_forward.1} parent=11 // pred_fallthru
        _
      // Predicated region
      $region33: #{seq_encoder_only_forward.1} parent=11 // pred_check
        %p397 = pneg %p173
      $region34: #{seq_encoder_only_forward.1} parent=11 // pred_check_branch
        %399 = sbr.rel (%p397) target = $region36
      $region35: #{seq_encoder_only_forward.1} parent=11 // pred_region
        _
      $region36: #{seq_encoder_only_forward.1} parent=11 // pred_fallthru
        _
      // Predicated region
      $region37: #{seq_encoder_only_forward.1} parent=11 // pred_check
        %p400 = pneg %p194
      $region38: #{seq_encoder_only_forward.1} parent=11 // pred_check_branch
        %402 = sbr.rel (%p400) target = $region40
      $region39: #{seq_encoder_only_forward.1} parent=11 // pred_region
        _
      $region40: #{seq_encoder_only_forward.1} parent=11 // pred_fallthru
        _
      // Predicated region
      $region41: #{seq_encoder_only_forward.1} parent=11 // pred_check
        %p403 = pneg %p215
      $region42: #{seq_encoder_only_forward.1} parent=11 // pred_check_branch
        %405 = sbr.rel (%p403) target = $region44
      $region43: #{seq_encoder_only_forward.1} parent=11 // pred_region
        _
      $region44: #{seq_encoder_only_forward.1} parent=11 // pred_fallthru
        _
      // Predicated region
      $region45: #{seq_encoder_only_forward.1} parent=11 // pred_check
        %p406 = pneg %p236
      $region46: #{seq_encoder_only_forward.1} parent=11 // pred_check_branch
        %408 = sbr.rel (%p406) target = $region48
      $region47: #{seq_encoder_only_forward.1} parent=11 // pred_region
        _
      $region48: #{seq_encoder_only_forward.1} parent=11 // pred_fallthru
        _
      // Predicated region
      $region49: #{seq_encoder_only_forward.1} parent=11 // pred_check
        %p409 = pneg %p257
      $region50: #{seq_encoder_only_forward.1} parent=11 // pred_check_branch
        %411 = sbr.rel (%p409) target = $region52
      $region51: #{seq_encoder_only_forward.1} parent=11 // pred_region
        _
      $region52: #{seq_encoder_only_forward.1} parent=11 // pred_fallthru
        _
      // Predicated region
      $region53: #{seq_encoder_only_forward.1} parent=11 // pred_check
        %p412 = pneg %p278
      $region54: #{seq_encoder_only_forward.1} parent=11 // pred_check_branch
        %414 = sbr.rel (%p412) target = $region56
      $region55: #{seq_encoder_only_forward.1} parent=11 // pred_region
        _
      $region56: #{seq_encoder_only_forward.1} parent=11 // pred_fallthru
        _
      // Predicated region
      $region57: #{seq_encoder_only_forward.1} parent=11 // pred_check
        %p415 = pneg %p299
      $region58: #{seq_encoder_only_forward.1} parent=11 // pred_check_branch
        %417 = sbr.rel (%p415) target = $region60
      $region59: #{seq_encoder_only_forward.1} parent=11 // pred_region
        _
      $region60: #{seq_encoder_only_forward.1} parent=11 // pred_fallthru
        _
      // Predicated region
      $region61: #{seq_encoder_only_forward.1} parent=11 // pred_check
        %p418 = pneg %p320
      $region62: #{seq_encoder_only_forward.1} parent=11 // pred_check_branch
        %420 = sbr.rel (%p418) target = $region64
      $region63: #{seq_encoder_only_forward.1} parent=11 // pred_region
        _
      $region64: #{seq_encoder_only_forward.1} parent=11 // pred_fallthru
        _
      // Predicated region
      $region65: #{seq_encoder_only_forward.1} parent=11 // pred_check
        %p421 = pneg %p341
      $region66: #{seq_encoder_only_forward.1} parent=11 // pred_check_branch
        %423 = sbr.rel (%p421) target = $region68
      $region67: #{seq_encoder_only_forward.1} parent=11 // pred_region
        _
      $region68: #{seq_encoder_only_forward.1} parent=11 // pred_fallthru
        _
    $region12: #{seq_encoder_only_forward.1} parent=5 // pred_fallthru
      _
    %p424 = scmp.lt.s32.totalorder %s21, 2
    // Predicated region
    $region69: #{seq_encoder_only_forward.1} parent=5 // pred_check
      %p425 = pneg %p424
    $region70: #{seq_encoder_only_forward.1} parent=5 // pred_check_branch
      %427 = sbr.rel (%p425) target = $region72
    $region71: #{seq_encoder_only_forward.1} parent=5 // pred_region
      // Predicated region
      $region73: #{seq_encoder_only_forward.1} parent=71 // pred_check
        %p428 = pneg %p41
      $region74: #{seq_encoder_only_forward.1} parent=71 // pred_check_branch
        %430 = sbr.rel (%p428) target = $region76
      $region75: #{seq_encoder_only_forward.1} parent=71 // pred_region
        %p431 = scmp.lt.s32.totalorder %s21, 1
        %s432 = scalar_select %p431, %s21, 1
        %s433 = smul.addr %s432, 8
        %s434 = scalar_lea.vmem %s0, %s433
      $region76: #{seq_encoder_only_forward.1} parent=71 // pred_fallthru
        _
    $region72: #{seq_encoder_only_forward.1} parent=5 // pred_fallthru
      _
    %p435 = scmp.le.s32.totalorder 1, %s21
    %p436 = scmp.lt.s32.totalorder %s21, 3
    %p437 = pnand %p435, %p436
    %p438 = pneg %p437
    // Predicated region
    $region77: #{seq_encoder_only_forward.1} parent=5 // pred_check
      _
    $region78: #{seq_encoder_only_forward.1} parent=5 // pred_check_branch
      %440 = sbr.rel (%p437) target = $region80
    $region79: #{seq_encoder_only_forward.1} parent=5 // pred_region
      %s441 = ssub.s32 %s21, 1
      %p442 = scmp.lt.s32.totalorder %s26, 1
      %s443 = scalar_select %p442, %s26, 1
      %s444 = smul.addr %s443, 8
      %s445 = scalar_lea.vmem %s0, %s444
      %p446 = pneg %p47
      %p447 = pneg %p44
      %p448 = pneg %p68
      %p449 = pneg %p65
      %p450 = pneg %p89
      %p451 = pneg %p86
      %p452 = pneg %p110
      %p453 = pneg %p107
      %p454 = pneg %p131
      %p455 = pneg %p128
      %p456 = pneg %p152
      %p457 = pneg %p149
      %p458 = pneg %p173
      %p459 = pneg %p170
      %p460 = pneg %p194
      %p461 = pneg %p191
      %p462 = pneg %p215
      %p463 = pneg %p212
      %p464 = pneg %p236
      %p465 = pneg %p233
      %p466 = pneg %p257
      %p467 = pneg %p254
      %p468 = pneg %p278
      %p469 = pneg %p275
      %p470 = pneg %p299
      %p471 = pneg %p296
      %p472 = pneg %p320
      %p473 = pneg %p317
      %p474 = pneg %p341
      %p475 = pneg %p338
      %p476 = pneg %p367
      %p477 = pneg %p364
      %p478 = scmp.lt.s32.totalorder %s26, 1
      %s479 = scalar_select %p478, %s26, 1
      %s480 = smul.addr %s479, 8
      %s481 = scalar_lea.vmem %s15, %s480
      %p482 = scmp.lt.s32.totalorder %s26, 1
      %s483 = scalar_select %p482, %s26, 1
      %s484 = smul.addr %s483, 8
      %s485 = scalar_lea.vmem %s0, %s484
      %p486 = scmp.lt.s32.totalorder %s26, 1
      %s487 = scalar_select %p486, %s26, 1
      %s488 = smul.addr %s487, 8
      %s489 = scalar_lea.vmem %s15, %s488
      %v491 = vld [vmem:[%s485] sm:$0xff]
      %v492 = vpack.c.bf16 %v491, %v491
      %v493 = vld [vmem:[%s1] sm:$0xf]
      %v494 = vld [vmem:[%s1 + $0x4] sm:$0xf]
      %v495 = vld [vmem:[%s1 + $0x8] sm:$0xf]
      %v496 = vld [vmem:[%s1 + $0xc] sm:$0xf]
      %v497 = vld [vmem:[%s2] sm:$0x1]
      %v499 = vperm.slane %v497, 0
      %v505 = vunpack.c.l.b16 %v493
      %v506 = vunpack.c.l.b16 %v494
      %v507 = vunpack.c.l.b16 %v495
      %v508 = vunpack.c.l.b16 %v496
      %v509 = vpack.c.b16 %v506, %v505
      %v510 = vpack.c.b16 %v508, %v507
      %vm513 = vcmask 261120
      %v515 = vsel %vm513, %v492, 0
      %517 = vmatpush.bf16.msra.mxu0 0
      %518 = vmatpush.bf16.msra.mxu0 0
      %519 = vmatpush.bf16.msra.mxu0 0
      %520 = vmatpush.bf16.msra.mxu0 0
      %521 = vmatpush.bf16.msra.mxu0 0
      %522 = vmatpush.bf16.msra.mxu0 0
      %523 = vmatpush.bf16.msra.mxu0 %v510
      %524 = vmatpush.bf16.msra.mxu0 %v509
      %525 = vmatmul.bf16.gmra.mxu0 %v515
      %v526 = vpop.f32.mrf.mxu0
      %v527 = vadd.f32 %v499, %v526
      %v528 = vpop.f32.mrf.mxu0
      %529 = vdwg.mxu0
      %v530 = vpack.c.bf16 %v527, %v527
      %532 = vrot.lane.b32.xlu0 %v530, 96
      %v533 = vpop.permute.xlu0 %532
      %vm534 = vcmask 64512
      %v536 = vsel %vm534, %v530, 0
      %v539 = vsel %vm534, %v533, 0
      %541 = vmatpush.bf16.xpose.msra.mxu0 0
      %542 = vmatpush.bf16.xpose.msra.mxu0 0
      %543 = vmatpush.bf16.xpose.msra.mxu0 0
      %544 = vmatpush.bf16.xpose.msra.mxu0 0
      %545 = vmatpush.bf16.xpose.msra.mxu0 0
      %546 = vmatpush.bf16.xpose.msra.mxu0 0
      %547 = vmatpush.bf16.xpose.msra.mxu0 0
      %548 = vmatpush.bf16.xpose.msra.mxu0 %v539
      %549 = vmatmul.bf16.gmra.mxu0 %v536
      %v550 = vpop.f32.mrf.mxu0
      %v551 = vadd.f32 0.0, %v550
      %v552 = vpop.f32.mrf.mxu0
      %553 = vdwg.mxu0
      %v554 = vmul.f32 %v551, 0.35355338
      %v555 = vsel %vm534, %v554, -inf
      %556 = vmax.xlane.f32.xlu0 %v555
      %v557 = vpop.xlane.xlu0 %556
      %v558 = vsub.f32 %v554, %v557
      %v559 = vmul.f32 %v558, 1.442695
      %v560 = vpow.pop %v559
      %v561 = vsel %vm534, %v560, 0.0
      %562 = vadd.xlane.f32.xlu0 %v561
      %v563 = vpop.xlane.xlu0 %562
      %v564 = vrcp.pop %v563
      %v565 = vmul.f32 %v560, %v564
      %v566 = vpack.c.bf16 %v565, %v565
      %567 = vrot.lane.b32.xlu0 %v530, 64
      %v568 = vpop.permute.xlu0 %567
      %v570 = vsel %vm534, %v566, 0
      %vm572 = vcmask 1043456
      %v574 = vsel %vm572, %v568, 0
      %576 = vmatpush.bf16.msra.mxu0 0
      %577 = vmatpush.bf16.msra.mxu0 0
      %578 = vmatpush.bf16.msra.mxu0 0
      %579 = vmatpush.bf16.msra.mxu0 0
      %580 = vmatpush.bf16.msra.mxu0 0
      %581 = vmatpush.bf16.msra.mxu0 0
      %582 = vmatpush.bf16.msra.mxu0 0
      %583 = vmatpush.bf16.msra.mxu0 %v574
      %584 = vmatmul.bf16.gmra.mxu0 %v570
      %v585 = vpop.f32.mrf.mxu0
      %v586 = vadd.f32 0.0, %v585
      %v587 = vpop.f32.mrf.mxu0
      %588 = vdwg.mxu0
      %589 = vrot.lane.b32.xlu0 %v530, 120
      %v590 = vpop.permute.xlu0 %589
      %591 = vrot.lane.b32.xlu0 %v530, 88
      %v592 = vpop.permute.xlu0 %591
      %v594 = vsel %vm534, %v590, 0
      %v597 = vsel %vm534, %v592, 0
      %599 = vmatpush.bf16.xpose.msra.mxu0 0
      %600 = vmatpush.bf16.xpose.msra.mxu0 0
      %601 = vmatpush.bf16.xpose.msra.mxu0 0
      %602 = vmatpush.bf16.xpose.msra.mxu0 0
      %603 = vmatpush.bf16.xpose.msra.mxu0 0
      %604 = vmatpush.bf16.xpose.msra.mxu0 0
      %605 = vmatpush.bf16.xpose.msra.mxu0 0
      %606 = vmatpush.bf16.xpose.msra.mxu0 %v597
      %607 = vmatmul.bf16.gmra.mxu0 %v594
      %v608 = vpop.f32.mrf.mxu0
      %v609 = vadd.f32 0.0, %v608
      %v610 = vpop.f32.mrf.mxu0
      %611 = vdwg.mxu0
      %v612 = vmul.f32 %v609, 0.35355338
      %v613 = vsel %vm534, %v612, -inf
      %614 = vmax.xlane.f32.xlu0 %v613
      %v615 = vpop.xlane.xlu0 %614
      %v616 = vsub.f32 %v612, %v615
      %v617 = vmul.f32 %v616, 1.442695
      %v618 = vpow.pop %v617
      %v619 = vsel %vm534, %v618, 0.0
      %620 = vadd.xlane.f32.xlu0 %v619
      %v621 = vpop.xlane.xlu0 %620
      %v622 = vrcp.pop %v621
      %v623 = vmul.f32 %v618, %v622
      %v624 = vpack.c.bf16 %v623, %v623
      %625 = vrot.lane.b32.xlu0 %v530, 56
      %v626 = vpop.permute.xlu0 %625
      %v628 = vsel %vm534, %v624, 0
      %v631 = vsel %vm572, %v626, 0
      %633 = vmatpush.bf16.msra.mxu0 0
      %634 = vmatpush.bf16.msra.mxu0 0
      %635 = vmatpush.bf16.msra.mxu0 0
      %636 = vmatpush.bf16.msra.mxu0 0
      %637 = vmatpush.bf16.msra.mxu0 0
      %638 = vmatpush.bf16.msra.mxu0 0
      %639 = vmatpush.bf16.msra.mxu0 0
      %640 = vmatpush.bf16.msra.mxu0 %v631
      %641 = vmatmul.bf16.gmra.mxu0 %v628
      %v642 = vpop.f32.mrf.mxu0
      %v643 = vadd.f32 0.0, %v642
      %v644 = vpop.f32.mrf.mxu0
      %645 = vdwg.mxu0
      %646 = vrot.lane.b32.xlu0 %v530, 112
      %v647 = vpop.permute.xlu0 %646
      %648 = vrot.lane.b32.xlu0 %v530, 80
      %v649 = vpop.permute.xlu0 %648
      %v651 = vsel %vm534, %v647, 0
      %v654 = vsel %vm534, %v649, 0
      %656 = vmatpush.bf16.xpose.msra.mxu0 0
      %657 = vmatpush.bf16.xpose.msra.mxu0 0
      %658 = vmatpush.bf16.xpose.msra.mxu0 0
      %659 = vmatpush.bf16.xpose.msra.mxu0 0
      %660 = vmatpush.bf16.xpose.msra.mxu0 0
      %661 = vmatpush.bf16.xpose.msra.mxu0 0
      %662 = vmatpush.bf16.xpose.msra.mxu0 0
      %663 = vmatpush.bf16.xpose.msra.mxu0 %v654
      %664 = vmatmul.bf16.gmra.mxu0 %v651
      %v665 = vpop.f32.mrf.mxu0
      %v666 = vadd.f32 0.0, %v665
      %v667 = vpop.f32.mrf.mxu0
      %668 = vdwg.mxu0
      %v669 = vmul.f32 %v666, 0.35355338
      %v670 = vsel %vm534, %v669, -inf
      %671 = vmax.xlane.f32.xlu0 %v670
      %v672 = vpop.xlane.xlu0 %671
      %v673 = vsub.f32 %v669, %v672
      %v674 = vmul.f32 %v673, 1.442695
      %v675 = vpow.pop %v674
      %v676 = vsel %vm534, %v675, 0.0
      %677 = vadd.xlane.f32.xlu0 %v676
      %v678 = vpop.xlane.xlu0 %677
      %v679 = vrcp.pop %v678
      %v680 = vmul.f32 %v675, %v679
      %v681 = vpack.c.bf16 %v680, %v680
      %682 = vrot.lane.b32.xlu0 %v530, 48
      %v683 = vpop.permute.xlu0 %682
      %v685 = vsel %vm534, %v681, 0
      %v688 = vsel %vm572, %v683, 0
      %690 = vmatpush.bf16.msra.mxu0 0
      %691 = vmatpush.bf16.msra.mxu0 0
      %692 = vmatpush.bf16.msra.mxu0 0
      %693 = vmatpush.bf16.msra.mxu0 0
      %694 = vmatpush.bf16.msra.mxu0 0
      %695 = vmatpush.bf16.msra.mxu0 0
      %696 = vmatpush.bf16.msra.mxu0 0
      %697 = vmatpush.bf16.msra.mxu0 %v688
      %698 = vmatmul.bf16.gmra.mxu0 %v685
      %v699 = vpop.f32.mrf.mxu0
      %v700 = vadd.f32 0.0, %v699
      %v701 = vpop.f32.mrf.mxu0
      %702 = vdwg.mxu0
      %703 = vrot.lane.b32.xlu0 %v530, 104
      %v704 = vpop.permute.xlu0 %703
      %705 = vrot.lane.b32.xlu0 %v530, 72
      %v706 = vpop.permute.xlu0 %705
      %v708 = vsel %vm534, %v704, 0
      %v711 = vsel %vm534, %v706, 0
      %713 = vmatpush.bf16.xpose.msra.mxu0 0
      %714 = vmatpush.bf16.xpose.msra.mxu0 0
      %715 = vmatpush.bf16.xpose.msra.mxu0 0
      %716 = vmatpush.bf16.xpose.msra.mxu0 0
      %717 = vmatpush.bf16.xpose.msra.mxu0 0
      %718 = vmatpush.bf16.xpose.msra.mxu0 0
      %719 = vmatpush.bf16.xpose.msra.mxu0 0
      %720 = vmatpush.bf16.xpose.msra.mxu0 %v711
      %721 = vmatmul.bf16.gmra.mxu0 %v708
      %v722 = vpop.f32.mrf.mxu0
      %v723 = vadd.f32 0.0, %v722
      %v724 = vpop.f32.mrf.mxu0
      %725 = vdwg.mxu0
      %v726 = vmul.f32 %v723, 0.35355338
      %v727 = vsel %vm534, %v726, -inf
      %728 = vmax.xlane.f32.xlu0 %v727
      %v729 = vpop.xlane.xlu0 %728
      %v730 = vsub.f32 %v726, %v729
      %v731 = vmul.f32 %v730, 1.442695
      %v732 = vpow.pop %v731
      %v733 = vsel %vm534, %v732, 0.0
      %734 = vadd.xlane.f32.xlu0 %v733
      %v735 = vpop.xlane.xlu0 %734
      %v736 = vrcp.pop %v735
      %v737 = vmul.f32 %v732, %v736
      %v738 = vpack.c.bf16 %v737, %v737
      %739 = vrot.lane.b32.xlu0 %v530, 40
      %v740 = vpop.permute.xlu0 %739
      %v742 = vsel %vm534, %v738, 0
      %v745 = vsel %vm572, %v740, 0
      %747 = vmatpush.bf16.msra.mxu0 0
      %748 = vmatpush.bf16.msra.mxu0 0
      %749 = vmatpush.bf16.msra.mxu0 0
      %750 = vmatpush.bf16.msra.mxu0 0
      %751 = vmatpush.bf16.msra.mxu0 0
      %752 = vmatpush.bf16.msra.mxu0 0
      %753 = vmatpush.bf16.msra.mxu0 0
      %754 = vmatpush.bf16.msra.mxu0 %v745
      %755 = vmatmul.bf16.gmra.mxu0 %v742
      %v756 = vpop.f32.mrf.mxu0
      %v757 = vadd.f32 0.0, %v756
      %v758 = vpop.f32.mrf.mxu0
      %759 = vdwg.mxu0
      %761 = vrot.lane.b32.xlu0 %v643, 8
      %v762 = vpop.permute.xlu0 %761
      %765 = vrot.lane.b32.xlu0 %v700, 16
      %v766 = vpop.permute.xlu0 %765
      %769 = vrot.lane.b32.xlu0 %v757, 24
      %v770 = vpop.permute.xlu0 %769
      %v772 = vsel %vm534, %v586, %v762
      %vm773 = vcmask 130048
      %v774 = vsel %vm773, %v772, %v766
      %vm775 = vcmask 195584
      %v776 = vsel %vm775, %v774, %v770
      %v777 = vpack.c.bf16 %v776, %v776
      %v778 = vld [vmem:[%s3] sm:$0xf]
      %v779 = vld [vmem:[%s3 + $0x4] sm:$0xf]
      %v780 = vld [vmem:[%s3 + $0x8] sm:$0xf]
      %v781 = vld [vmem:[%s3 + $0xc] sm:$0xf]
      %v782 = vld [vmem:[%s4] sm:$0x1]
      %v784 = vperm.slane %v782, 0
      %v790 = vunpack.c.l.b16 %v778
      %v791 = vunpack.c.l.b16 %v779
      %v792 = vunpack.c.l.b16 %v780
      %v793 = vunpack.c.l.b16 %v781
      %v794 = vpack.c.b16 %v791, %v790
      %v795 = vpack.c.b16 %v793, %v792
      %v799 = vsel %vm513, %v777, 0
      %801 = vmatpush.bf16.msra.mxu0 0
      %802 = vmatpush.bf16.msra.mxu0 0
      %803 = vmatpush.bf16.msra.mxu0 0
      %804 = vmatpush.bf16.msra.mxu0 0
      %805 = vmatpush.bf16.msra.mxu0 0
      %806 = vmatpush.bf16.msra.mxu0 0
      %807 = vmatpush.bf16.msra.mxu0 %v795
      %808 = vmatpush.bf16.msra.mxu0 %v794
      %809 = vmatmul.bf16.gmra.mxu0 %v799
      %v810 = vpop.f32.mrf.mxu0
      %v811 = vadd.f32 %v784, %v810
      %v812 = vpop.f32.mrf.mxu0
      %813 = vdwg.mxu0
      %v814 = vadd.f32 %v811, %v491
      %v815 = vld [vmem:[%s5] sm:$0x1]
      %v816 = vld [vmem:[%s6] sm:$0x1]
      %v817 = vsel %vm513, %v814, 0.0
      %818 = vadd.xlane.f32.xlu0 %v817
      %v819 = vpop.xlane.xlu0 %818
      %v820 = vrcp.pop 32.0
      %v821 = vmul.f32 32.0, %v820
      %v822 = vsub.f32 1.0, %v821
      %v823 = vmul.f32 %v820, %v822
      %v824 = vadd.f32 %v820, %v823
      %vm825 = vweird.f32 %v820
      %v826 = vsel %vm825, %v820, %v824
      %v827 = vmul.f32 %v819, %v826
      %v828 = vsub.f32 %v814, %v827
      %v829 = vmul.f32 %v828, %v828
      %v830 = vsel %vm513, %v829, 0.0
      %831 = vadd.xlane.f32.xlu0 %v830
      %v832 = vpop.xlane.xlu0 %831
      %v833 = vmul.f32 %v832, %v826
      %v834 = vadd.f32 %v833, 1e-05
      %v835 = vrsqrt.pop %v834
      %v836 = vmul.f32 %v835, %v834
      %v837 = vmul.f32 %v836, %v835
      %v838 = vmul.f32 0.5, %v837
      %v839 = vsub.f32 1.5, %v838
      %v840 = vmul.f32 %v835, %v839
      %vm841 = vweird.f32 %v834
      %vm842 = vweird.f32 %v835
      %vm843 = vmor %vm841, %vm842
      %v844 = vsel %vm843, %v835, %v840
      %v845 = vmul.f32 %v828, %v844
      %v847 = vperm.slane %v815, 0
      %v849 = vmul.f32 %v845, %v847
      %v851 = vperm.slane %v816, 0
      %v853 = vadd.f32 %v849, %v851
      %v854 = vpack.c.bf16 %v853, %v853
      %v855 = vld [vmem:[%s7] sm:$0xf]
      %v856 = vld [vmem:[%s7 + $0x4] sm:$0xf]
      %v857 = vld [vmem:[%s7 + $0x8] sm:$0xf]
      %v858 = vld [vmem:[%s7 + $0xc] sm:$0xf]
      %v859 = vld [vmem:[%s8] sm:$0x1]
      %v861 = vperm.slane %v859, 0
      %v867 = vunpack.c.l.b16 %v855
      %v868 = vunpack.c.l.b16 %v856
      %v869 = vunpack.c.l.b16 %v857
      %v870 = vunpack.c.l.b16 %v858
      %v871 = vpack.c.b16 %v868, %v867
      %v872 = vpack.c.b16 %v870, %v869
      %v876 = vsel %vm513, %v854, 0
      %878 = vmatpush.bf16.msra.mxu0 0
      %879 = vmatpush.bf16.msra.mxu0 0
      %880 = vmatpush.bf16.msra.mxu0 0
      %881 = vmatpush.bf16.msra.mxu0 0
      %882 = vmatpush.bf16.msra.mxu0 0
      %883 = vmatpush.bf16.msra.mxu0 0
      %884 = vmatpush.bf16.msra.mxu0 %v872
      %885 = vmatpush.bf16.msra.mxu0 %v871
      %886 = vmatmul.bf16.gmra.mxu0 %v876
      %v887 = vpop.f32.mrf.mxu0
      %v888 = vadd.f32 %v861, %v887
      %v889 = vpop.f32.mrf.mxu0
      %890 = vdwg.mxu0
      %v891 = vmax.f32 %v888, 0.0
      %v892 = vpack.c.bf16 %v891, %v891
      %v893 = vld [vmem:[%s9] sm:$0xf]
      %v894 = vld [vmem:[%s9 + $0x4] sm:$0xf]
      %v895 = vld [vmem:[%s9 + $0x8] sm:$0xf]
      %v896 = vld [vmem:[%s9 + $0xc] sm:$0xf]
      %v897 = vld [vmem:[%s9 + $0x10] sm:$0xf]
      %v898 = vld [vmem:[%s9 + $0x14] sm:$0xf]
      %v899 = vld [vmem:[%s9 + $0x18] sm:$0xf]
      %v900 = vld [vmem:[%s9 + $0x1c] sm:$0xf]
      %v901 = vld [vmem:[%s10] sm:$0x1]
      %v903 = vperm.slane %v901, 0
      %v913 = vunpack.c.l.b16 %v893
      %v914 = vunpack.c.l.b16 %v894
      %v915 = vunpack.c.l.b16 %v895
      %v916 = vunpack.c.l.b16 %v896
      %v917 = vunpack.c.l.b16 %v897
      %v918 = vunpack.c.l.b16 %v898
      %v919 = vunpack.c.l.b16 %v899
      %v920 = vunpack.c.l.b16 %v900
      %v921 = vpack.c.b16 %v914, %v913
      %v922 = vpack.c.b16 %v916, %v915
      %v923 = vpack.c.b16 %v918, %v917
      %v924 = vpack.c.b16 %v920, %v919
      %vm929 = vcmask 523264
      %v931 = vsel %vm929, %v892, 0
      %933 = vmatpush.bf16.msra.mxu0 0
      %934 = vmatpush.bf16.msra.mxu0 0
      %935 = vmatpush.bf16.msra.mxu0 0
      %936 = vmatpush.bf16.msra.mxu0 0
      %937 = vmatpush.bf16.msra.mxu0 %v924
      %938 = vmatpush.bf16.msra.mxu0 %v923
      %939 = vmatpush.bf16.msra.mxu0 %v922
      %940 = vmatpush.bf16.msra.mxu0 %v921
      %941 = vmatmul.bf16.gmra.mxu0 %v931
      %v942 = vpop.f32.mrf.mxu0
      %v943 = vadd.f32 %v903, %v942
      %v944 = vpop.f32.mrf.mxu0
      %945 = vdwg.mxu0
      %v946 = vadd.f32 %v943, %v853
      %v947 = vld [vmem:[%s11] sm:$0x1]
      %v948 = vld [vmem:[%s12] sm:$0x1]
      %v949 = vsel %vm513, %v946, 0.0
      %950 = vadd.xlane.f32.xlu0 %v949
      %v951 = vpop.xlane.xlu0 %950
      %v952 = vmul.f32 %v951, %v826
      %v953 = vsub.f32 %v946, %v952
      %v954 = vmul.f32 %v953, %v953
      %v955 = vsel %vm513, %v954, 0.0
      %956 = vadd.xlane.f32.xlu0 %v955
      %v957 = vpop.xlane.xlu0 %956
      %v958 = vmul.f32 %v957, %v826
      %v959 = vadd.f32 %v958, 1e-05
      %v960 = vrsqrt.pop %v959
      %v961 = vmul.f32 %v960, %v959
      %v962 = vmul.f32 %v961, %v960
      %v963 = vmul.f32 0.5, %v962
      %v964 = vsub.f32 1.5, %v963
      %v965 = vmul.f32 %v960, %v964
      %vm966 = vweird.f32 %v959
      %vm967 = vweird.f32 %v960
      %vm968 = vmor %vm966, %vm967
      %v969 = vsel %vm968, %v960, %v965
      %v970 = vmul.f32 %v953, %v969
      %v972 = vperm.slane %v947, 0
      %v974 = vmul.f32 %v970, %v972
      %v976 = vperm.slane %v948, 0
      %v978 = vadd.f32 %v974, %v976
      %v979 = vpack.c.bf16 %v978, %v978
      %s980 = scalar_lea.vmem %s1, 16
      %v981 = vld [vmem:[%s980] sm:$0xf]
      %v982 = vld [vmem:[%s980 + $0x4] sm:$0xf]
      %v983 = vld [vmem:[%s980 + $0x8] sm:$0xf]
      %v984 = vld [vmem:[%s980 + $0xc] sm:$0xf]
      %s985 = scalar_lea.vmem %s2, 1
      %v986 = vld [vmem:[%s985] sm:$0x1]
      %v988 = vperm.slane %v986, 0
      %v994 = vunpack.c.l.b16 %v981
      %v995 = vunpack.c.l.b16 %v982
      %v996 = vunpack.c.l.b16 %v983
      %v997 = vunpack.c.l.b16 %v984
      %v998 = vpack.c.b16 %v995, %v994
      %v999 = vpack.c.b16 %v997, %v996
      %v1003 = vsel %vm513, %v979, 0
      %1005 = vmatpush.bf16.msra.mxu0 0
      %1006 = vmatpush.bf16.msra.mxu0 0
      %1007 = vmatpush.bf16.msra.mxu0 0
      %1008 = vmatpush.bf16.msra.mxu0 0
      %1009 = vmatpush.bf16.msra.mxu0 0
      %1010 = vmatpush.bf16.msra.mxu0 0
      %1011 = vmatpush.bf16.msra.mxu0 %v999
      %1012 = vmatpush.bf16.msra.mxu0 %v998
      %1013 = vmatmul.bf16.gmra.mxu0 %v1003
      %v1014 = vpop.f32.mrf.mxu0
      %v1015 = vadd.f32 %v988, %v1014
      %v1016 = vpop.f32.mrf.mxu0
      %1017 = vdwg.mxu0
      %v1018 = vpack.c.bf16 %v1015, %v1015
      %1020 = vrot.lane.b32.xlu0 %v1018, 96
      %v1021 = vpop.permute.xlu0 %1020
      %v1023 = vsel %vm534, %v1018, 0
      %v1026 = vsel %vm534, %v1021, 0
      %1028 = vmatpush.bf16.xpose.msra.mxu0 0
      %1029 = vmatpush.bf16.xpose.msra.mxu0 0
      %1030 = vmatpush.bf16.xpose.msra.mxu0 0
      %1031 = vmatpush.bf16.xpose.msra.mxu0 0
      %1032 = vmatpush.bf16.xpose.msra.mxu0 0
      %1033 = vmatpush.bf16.xpose.msra.mxu0 0
      %1034 = vmatpush.bf16.xpose.msra.mxu0 0
      %1035 = vmatpush.bf16.xpose.msra.mxu0 %v1026
      %1036 = vmatmul.bf16.gmra.mxu0 %v1023
      %v1037 = vpop.f32.mrf.mxu0
      %v1038 = vadd.f32 0.0, %v1037
      %v1039 = vpop.f32.mrf.mxu0
      %1040 = vdwg.mxu0
      %v1041 = vmul.f32 %v1038, 0.35355338
      %v1042 = vsel %vm534, %v1041, -inf
      %1043 = vmax.xlane.f32.xlu0 %v1042
      %v1044 = vpop.xlane.xlu0 %1043
      %v1045 = vsub.f32 %v1041, %v1044
      %v1046 = vmul.f32 %v1045, 1.442695
      %v1047 = vpow.pop %v1046
      %v1048 = vsel %vm534, %v1047, 0.0
      %1049 = vadd.xlane.f32.xlu0 %v1048
      %v1050 = vpop.xlane.xlu0 %1049
      %v1051 = vrcp.pop %v1050
      %v1052 = vmul.f32 %v1047, %v1051
      %v1053 = vpack.c.bf16 %v1052, %v1052
      %1054 = vrot.lane.b32.xlu0 %v1018, 64
      %v1055 = vpop.permute.xlu0 %1054
      %v1057 = vsel %vm534, %v1053, 0
      %v1060 = vsel %vm572, %v1055, 0
      %1062 = vmatpush.bf16.msra.mxu0 0
      %1063 = vmatpush.bf16.msra.mxu0 0
      %1064 = vmatpush.bf16.msra.mxu0 0
      %1065 = vmatpush.bf16.msra.mxu0 0
      %1066 = vmatpush.bf16.msra.mxu0 0
      %1067 = vmatpush.bf16.msra.mxu0 0
      %1068 = vmatpush.bf16.msra.mxu0 0
      %1069 = vmatpush.bf16.msra.mxu0 %v1060
      %1070 = vmatmul.bf16.gmra.mxu0 %v1057
      %v1071 = vpop.f32.mrf.mxu0
      %v1072 = vadd.f32 0.0, %v1071
      %v1073 = vpop.f32.mrf.mxu0
      %1074 = vdwg.mxu0
      %1075 = vrot.lane.b32.xlu0 %v1018, 120
      %v1076 = vpop.permute.xlu0 %1075
      %1077 = vrot.lane.b32.xlu0 %v1018, 88
      %v1078 = vpop.permute.xlu0 %1077
      %v1080 = vsel %vm534, %v1076, 0
      %v1083 = vsel %vm534, %v1078, 0
      %1085 = vmatpush.bf16.xpose.msra.mxu0 0
      %1086 = vmatpush.bf16.xpose.msra.mxu0 0
      %1087 = vmatpush.bf16.xpose.msra.mxu0 0
      %1088 = vmatpush.bf16.xpose.msra.mxu0 0
      %1089 = vmatpush.bf16.xpose.msra.mxu0 0
      %1090 = vmatpush.bf16.xpose.msra.mxu0 0
      %1091 = vmatpush.bf16.xpose.msra.mxu0 0
      %1092 = vmatpush.bf16.xpose.msra.mxu0 %v1083
      %1093 = vmatmul.bf16.gmra.mxu0 %v1080
      %v1094 = vpop.f32.mrf.mxu0
      %v1095 = vadd.f32 0.0, %v1094
      %v1096 = vpop.f32.mrf.mxu0
      %1097 = vdwg.mxu0
      %v1098 = vmul.f32 %v1095, 0.35355338
      %v1099 = vsel %vm534, %v1098, -inf
      %1100 = vmax.xlane.f32.xlu0 %v1099
      %v1101 = vpop.xlane.xlu0 %1100
      %v1102 = vsub.f32 %v1098, %v1101
      %v1103 = vmul.f32 %v1102, 1.442695
      %v1104 = vpow.pop %v1103
      %v1105 = vsel %vm534, %v1104, 0.0
      %1106 = vadd.xlane.f32.xlu0 %v1105
      %v1107 = vpop.xlane.xlu0 %1106
      %v1108 = vrcp.pop %v1107
      %v1109 = vmul.f32 %v1104, %v1108
      %v1110 = vpack.c.bf16 %v1109, %v1109
      %1111 = vrot.lane.b32.xlu0 %v1018, 56
      %v1112 = vpop.permute.xlu0 %1111
      %v1114 = vsel %vm534, %v1110, 0
      %v1117 = vsel %vm572, %v1112, 0
      %1119 = vmatpush.bf16.msra.mxu0 0
      %1120 = vmatpush.bf16.msra.mxu0 0
      %1121 = vmatpush.bf16.msra.mxu0 0
      %1122 = vmatpush.bf16.msra.mxu0 0
      %1123 = vmatpush.bf16.msra.mxu0 0
      %1124 = vmatpush.bf16.msra.mxu0 0
      %1125 = vmatpush.bf16.msra.mxu0 0
      %1126 = vmatpush.bf16.msra.mxu0 %v1117
      %1127 = vmatmul.bf16.gmra.mxu0 %v1114
      %v1128 = vpop.f32.mrf.mxu0
      %v1129 = vadd.f32 0.0, %v1128
      %v1130 = vpop.f32.mrf.mxu0
      %1131 = vdwg.mxu0
      %1132 = vrot.lane.b32.xlu0 %v1018, 112
      %v1133 = vpop.permute.xlu0 %1132
      %1134 = vrot.lane.b32.xlu0 %v1018, 80
      %v1135 = vpop.permute.xlu0 %1134
      %v1137 = vsel %vm534, %v1133, 0
      %v1140 = vsel %vm534, %v1135, 0
      %1142 = vmatpush.bf16.xpose.msra.mxu0 0
      %1143 = vmatpush.bf16.xpose.msra.mxu0 0
      %1144 = vmatpush.bf16.xpose.msra.mxu0 0
      %1145 = vmatpush.bf16.xpose.msra.mxu0 0
      %1146 = vmatpush.bf16.xpose.msra.mxu0 0
      %1147 = vmatpush.bf16.xpose.msra.mxu0 0
      %1148 = vmatpush.bf16.xpose.msra.mxu0 0
      %1149 = vmatpush.bf16.xpose.msra.mxu0 %v1140
      %1150 = vmatmul.bf16.gmra.mxu0 %v1137
      %v1151 = vpop.f32.mrf.mxu0
      %v1152 = vadd.f32 0.0, %v1151
      %v1153 = vpop.f32.mrf.mxu0
      %1154 = vdwg.mxu0
      %v1155 = vmul.f32 %v1152, 0.35355338
      %v1156 = vsel %vm534, %v1155, -inf
      %1157 = vmax.xlane.f32.xlu0 %v1156
      %v1158 = vpop.xlane.xlu0 %1157
      %v1159 = vsub.f32 %v1155, %v1158
      %v1160 = vmul.f32 %v1159, 1.442695
      %v1161 = vpow.pop %v1160
      %v1162 = vsel %vm534, %v1161, 0.0
      %1163 = vadd.xlane.f32.xlu0 %v1162
      %v1164 = vpop.xlane.xlu0 %1163
      %v1165 = vrcp.pop %v1164
      %v1166 = vmul.f32 %v1161, %v1165
      %v1167 = vpack.c.bf16 %v1166, %v1166
      %1168 = vrot.lane.b32.xlu0 %v1018, 48
      %v1169 = vpop.permute.xlu0 %1168
      %v1171 = vsel %vm534, %v1167, 0
      %v1174 = vsel %vm572, %v1169, 0
      %1176 = vmatpush.bf16.msra.mxu0 0
      %1177 = vmatpush.bf16.msra.mxu0 0
      %1178 = vmatpush.bf16.msra.mxu0 0
      %1179 = vmatpush.bf16.msra.mxu0 0
      %1180 = vmatpush.bf16.msra.mxu0 0
      %1181 = vmatpush.bf16.msra.mxu0 0
      %1182 = vmatpush.bf16.msra.mxu0 0
      %1183 = vmatpush.bf16.msra.mxu0 %v1174
      %1184 = vmatmul.bf16.gmra.mxu0 %v1171
      %v1185 = vpop.f32.mrf.mxu0
      %v1186 = vadd.f32 0.0, %v1185
      %v1187 = vpop.f32.mrf.mxu0
      %1188 = vdwg.mxu0
      %1189 = vrot.lane.b32.xlu0 %v1018, 104
      %v1190 = vpop.permute.xlu0 %1189
      %1191 = vrot.lane.b32.xlu0 %v1018, 72
      %v1192 = vpop.permute.xlu0 %1191
      %v1194 = vsel %vm534, %v1190, 0
      %v1197 = vsel %vm534, %v1192, 0
      %1199 = vmatpush.bf16.xpose.msra.mxu0 0
      %1200 = vmatpush.bf16.xpose.msra.mxu0 0
      %1201 = vmatpush.bf16.xpose.msra.mxu0 0
      %1202 = vmatpush.bf16.xpose.msra.mxu0 0
      %1203 = vmatpush.bf16.xpose.msra.mxu0 0
      %1204 = vmatpush.bf16.xpose.msra.mxu0 0
      %1205 = vmatpush.bf16.xpose.msra.mxu0 0
      %1206 = vmatpush.bf16.xpose.msra.mxu0 %v1197
      %1207 = vmatmul.bf16.gmra.mxu0 %v1194
      %v1208 = vpop.f32.mrf.mxu0
      %v1209 = vadd.f32 0.0, %v1208
      %v1210 = vpop.f32.mrf.mxu0
      %1211 = vdwg.mxu0
      %v1212 = vmul.f32 %v1209, 0.35355338
      %v1213 = vsel %vm534, %v1212, -inf
      %1214 = vmax.xlane.f32.xlu0 %v1213
      %v1215 = vpop.xlane.xlu0 %1214
      %v1216 = vsub.f32 %v1212, %v1215
      %v1217 = vmul.f32 %v1216, 1.442695
      %v1218 = vpow.pop %v1217
      %v1219 = vsel %vm534, %v1218, 0.0
      %1220 = vadd.xlane.f32.xlu0 %v1219
      %v1221 = vpop.xlane.xlu0 %1220
      %v1222 = vrcp.pop %v1221
      %v1223 = vmul.f32 %v1218, %v1222
      %v1224 = vpack.c.bf16 %v1223, %v1223
      %1225 = vrot.lane.b32.xlu0 %v1018, 40
      %v1226 = vpop.permute.xlu0 %1225
      %v1228 = vsel %vm534, %v1224, 0
      %v1231 = vsel %vm572, %v1226, 0
      %1233 = vmatpush.bf16.msra.mxu0 0
      %1234 = vmatpush.bf16.msra.mxu0 0
      %1235 = vmatpush.bf16.msra.mxu0 0
      %1236 = vmatpush.bf16.msra.mxu0 0
      %1237 = vmatpush.bf16.msra.mxu0 0
      %1238 = vmatpush.bf16.msra.mxu0 0
      %1239 = vmatpush.bf16.msra.mxu0 0
      %1240 = vmatpush.bf16.msra.mxu0 %v1231
      %1241 = vmatmul.bf16.gmra.mxu0 %v1228
      %v1242 = vpop.f32.mrf.mxu0
      %v1243 = vadd.f32 0.0, %v1242
      %v1244 = vpop.f32.mrf.mxu0
      %1245 = vdwg.mxu0
      %1247 = vrot.lane.b32.xlu0 %v1129, 8
      %v1248 = vpop.permute.xlu0 %1247
      %1251 = vrot.lane.b32.xlu0 %v1186, 16
      %v1252 = vpop.permute.xlu0 %1251
      %1255 = vrot.lane.b32.xlu0 %v1243, 24
      %v1256 = vpop.permute.xlu0 %1255
      %v1258 = vsel %vm534, %v1072, %v1248
      %v1259 = vsel %vm773, %v1258, %v1252
      %v1260 = vsel %vm775, %v1259, %v1256
      %v1261 = vpack.c.bf16 %v1260, %v1260
      %s1262 = scalar_lea.vmem %s3, 16
      %v1263 = vld [vmem:[%s1262] sm:$0xf]
      %v1264 = vld [vmem:[%s1262 + $0x4] sm:$0xf]
      %v1265 = vld [vmem:[%s1262 + $0x8] sm:$0xf]
      %v1266 = vld [vmem:[%s1262 + $0xc] sm:$0xf]
      %s1267 = scalar_lea.vmem %s4, 1
      %v1268 = vld [vmem:[%s1267] sm:$0x1]
      %v1270 = vperm.slane %v1268, 0
      %v1276 = vunpack.c.l.b16 %v1263
      %v1277 = vunpack.c.l.b16 %v1264
      %v1278 = vunpack.c.l.b16 %v1265
      %v1279 = vunpack.c.l.b16 %v1266
      %v1280 = vpack.c.b16 %v1277, %v1276
      %v1281 = vpack.c.b16 %v1279, %v1278
      %v1285 = vsel %vm513, %v1261, 0
      %1287 = vmatpush.bf16.msra.mxu0 0
      %1288 = vmatpush.bf16.msra.mxu0 0
      %1289 = vmatpush.bf16.msra.mxu0 0
      %1290 = vmatpush.bf16.msra.mxu0 0
      %1291 = vmatpush.bf16.msra.mxu0 0
      %1292 = vmatpush.bf16.msra.mxu0 0
      %1293 = vmatpush.bf16.msra.mxu0 %v1281
      %1294 = vmatpush.bf16.msra.mxu0 %v1280
      %1295 = vmatmul.bf16.gmra.mxu0 %v1285
      %v1296 = vpop.f32.mrf.mxu0
      %v1297 = vadd.f32 %v1270, %v1296
      %v1298 = vpop.f32.mrf.mxu0
      %1299 = vdwg.mxu0
      %v1300 = vadd.f32 %v1297, %v978
      %s1301 = scalar_lea.vmem %s5, 1
      %v1302 = vld [vmem:[%s1301] sm:$0x1]
      %s1303 = scalar_lea.vmem %s6, 1
      %v1304 = vld [vmem:[%s1303] sm:$0x1]
      %v1305 = vsel %vm513, %v1300, 0.0
      %1306 = vadd.xlane.f32.xlu0 %v1305
      %v1307 = vpop.xlane.xlu0 %1306
      %v1308 = vmul.f32 %v1307, %v826
      %v1309 = vsub.f32 %v1300, %v1308
      %v1310 = vmul.f32 %v1309, %v1309
      %v1311 = vsel %vm513, %v1310, 0.0
      %1312 = vadd.xlane.f32.xlu0 %v1311
      %v1313 = vpop.xlane.xlu0 %1312
      %v1314 = vmul.f32 %v1313, %v826
      %v1315 = vadd.f32 %v1314, 1e-05
      %v1316 = vrsqrt.pop %v1315
      %v1317 = vmul.f32 %v1316, %v1315
      %v1318 = vmul.f32 %v1317, %v1316
      %v1319 = vmul.f32 0.5, %v1318
      %v1320 = vsub.f32 1.5, %v1319
      %v1321 = vmul.f32 %v1316, %v1320
      %vm1322 = vweird.f32 %v1315
      %vm1323 = vweird.f32 %v1316
      %vm1324 = vmor %vm1322, %vm1323
      %v1325 = vsel %vm1324, %v1316, %v1321
      %v1326 = vmul.f32 %v1309, %v1325
      %v1328 = vperm.slane %v1302, 0
      %v1330 = vmul.f32 %v1326, %v1328
      %v1332 = vperm.slane %v1304, 0
      %v1334 = vadd.f32 %v1330, %v1332
      %v1335 = vpack.c.bf16 %v1334, %v1334
      %s1336 = scalar_lea.vmem %s7, 16
      %v1337 = vld [vmem:[%s1336] sm:$0xf]
      %v1338 = vld [vmem:[%s1336 + $0x4] sm:$0xf]
      %v1339 = vld [vmem:[%s1336 + $0x8] sm:$0xf]
      %v1340 = vld [vmem:[%s1336 + $0xc] sm:$0xf]
      %s1341 = scalar_lea.vmem %s8, 1
      %v1342 = vld [vmem:[%s1341] sm:$0x1]
      %v1344 = vperm.slane %v1342, 0
      %v1350 = vunpack.c.l.b16 %v1337
      %v1351 = vunpack.c.l.b16 %v1338
      %v1352 = vunpack.c.l.b16 %v1339
      %v1353 = vunpack.c.l.b16 %v1340
      %v1354 = vpack.c.b16 %v1351, %v1350
      %v1355 = vpack.c.b16 %v1353, %v1352
      %v1359 = vsel %vm513, %v1335, 0
      %1361 = vmatpush.bf16.msra.mxu0 0
      %1362 = vmatpush.bf16.msra.mxu0 0
      %1363 = vmatpush.bf16.msra.mxu0 0
      %1364 = vmatpush.bf16.msra.mxu0 0
      %1365 = vmatpush.bf16.msra.mxu0 0
      %1366 = vmatpush.bf16.msra.mxu0 0
      %1367 = vmatpush.bf16.msra.mxu0 %v1355
      %1368 = vmatpush.bf16.msra.mxu0 %v1354
      %1369 = vmatmul.bf16.gmra.mxu0 %v1359
      %v1370 = vpop.f32.mrf.mxu0
      %v1371 = vadd.f32 %v1344, %v1370
      %v1372 = vpop.f32.mrf.mxu0
      %1373 = vdwg.mxu0
      %v1374 = vmax.f32 %v1371, 0.0
      %v1375 = vpack.c.bf16 %v1374, %v1374
      %s1376 = scalar_lea.vmem %s9, 32
      %v1377 = vld [vmem:[%s1376] sm:$0xf]
      %v1378 = vld [vmem:[%s1376 + $0x4] sm:$0xf]
      %v1379 = vld [vmem:[%s1376 + $0x8] sm:$0xf]
      %v1380 = vld [vmem:[%s1376 + $0xc] sm:$0xf]
      %v1381 = vld [vmem:[%s1376 + $0x10] sm:$0xf]
      %v1382 = vld [vmem:[%s1376 + $0x14] sm:$0xf]
      %v1383 = vld [vmem:[%s1376 + $0x18] sm:$0xf]
      %v1384 = vld [vmem:[%s1376 + $0x1c] sm:$0xf]
      %s1385 = scalar_lea.vmem %s10, 1
      %v1386 = vld [vmem:[%s1385] sm:$0x1]
      %v1388 = vperm.slane %v1386, 0
      %v1398 = vunpack.c.l.b16 %v1377
      %v1399 = vunpack.c.l.b16 %v1378
      %v1400 = vunpack.c.l.b16 %v1379
      %v1401 = vunpack.c.l.b16 %v1380
      %v1402 = vunpack.c.l.b16 %v1381
      %v1403 = vunpack.c.l.b16 %v1382
      %v1404 = vunpack.c.l.b16 %v1383
      %v1405 = vunpack.c.l.b16 %v1384
      %v1406 = vpack.c.b16 %v1399, %v1398
      %v1407 = vpack.c.b16 %v1401, %v1400
      %v1408 = vpack.c.b16 %v1403, %v1402
      %v1409 = vpack.c.b16 %v1405, %v1404
      %v1415 = vsel %vm929, %v1375, 0
      %1417 = vmatpush.bf16.msra.mxu0 0
      %1418 = vmatpush.bf16.msra.mxu0 0
      %1419 = vmatpush.bf16.msra.mxu0 0
      %1420 = vmatpush.bf16.msra.mxu0 0
      %1421 = vmatpush.bf16.msra.mxu0 %v1409
      %1422 = vmatpush.bf16.msra.mxu0 %v1408
      %1423 = vmatpush.bf16.msra.mxu0 %v1407
      %1424 = vmatpush.bf16.msra.mxu0 %v1406
      %1425 = vmatmul.bf16.gmra.mxu0 %v1415
      %v1426 = vpop.f32.mrf.mxu0
      %v1427 = vadd.f32 %v1388, %v1426
      %v1428 = vpop.f32.mrf.mxu0
      %1429 = vdwg.mxu0
      %v1430 = vadd.f32 %v1427, %v1334
      %s1431 = scalar_lea.vmem %s11, 1
      %v1432 = vld [vmem:[%s1431] sm:$0x1]
      %s1433 = scalar_lea.vmem %s12, 1
      %v1434 = vld [vmem:[%s1433] sm:$0x1]
      %v1435 = vsel %vm513, %v1430, 0.0
      %1436 = vadd.xlane.f32.xlu0 %v1435
      %v1437 = vpop.xlane.xlu0 %1436
      %v1438 = vmul.f32 %v1437, %v826
      %v1439 = vsub.f32 %v1430, %v1438
      %v1440 = vmul.f32 %v1439, %v1439
      %v1441 = vsel %vm513, %v1440, 0.0
      %1442 = vadd.xlane.f32.xlu0 %v1441
      %v1443 = vpop.xlane.xlu0 %1442
      %v1444 = vmul.f32 %v1443, %v826
      %v1445 = vadd.f32 %v1444, 1e-05
      %v1446 = vrsqrt.pop %v1445
      %v1447 = vmul.f32 %v1446, %v1445
      %v1448 = vmul.f32 %v1447, %v1446
      %v1449 = vmul.f32 0.5, %v1448
      %v1450 = vsub.f32 1.5, %v1449
      %v1451 = vmul.f32 %v1446, %v1450
      %vm1452 = vweird.f32 %v1445
      %vm1453 = vweird.f32 %v1446
      %vm1454 = vmor %vm1452, %vm1453
      %v1455 = vsel %vm1454, %v1446, %v1451
      %v1456 = vmul.f32 %v1439, %v1455
      %v1458 = vperm.slane %v1432, 0
      %v1460 = vmul.f32 %v1456, %v1458
      %v1462 = vperm.slane %v1434, 0
      %v1464 = vadd.f32 %v1460, %v1462
      %v1465 = vpack.c.bf16 %v1464, %v1464
      %v1466 = vld [vmem:[%s13] sm:$0xf]
      %v1467 = vld [vmem:[%s13 + $0x4] sm:$0xf]
      %v1468 = vld [vmem:[%s13 + $0x8] sm:$0xf]
      %v1469 = vld [vmem:[%s13 + $0xc] sm:$0xf]
      %v1470 = vld [vmem:[%s14] sm:$0x1]
      %v1472 = vperm.slane %v1470, 0
      %v1478 = vunpack.c.l.b16 %v1466
      %v1479 = vunpack.c.l.b16 %v1467
      %v1480 = vunpack.c.l.b16 %v1468
      %v1481 = vunpack.c.l.b16 %v1469
      %v1482 = vpack.c.b16 %v1479, %v1478
      %v1483 = vpack.c.b16 %v1481, %v1480
      %v1487 = vsel %vm513, %v1465, 0
      %1489 = vmatpush.bf16.msra.mxu0 0
      %1490 = vmatpush.bf16.msra.mxu0 0
      %1491 = vmatpush.bf16.msra.mxu0 0
      %1492 = vmatpush.bf16.msra.mxu0 0
      %1493 = vmatpush.bf16.msra.mxu0 0
      %1494 = vmatpush.bf16.msra.mxu0 0
      %1495 = vmatpush.bf16.msra.mxu0 %v1483
      %1496 = vmatpush.bf16.msra.mxu0 %v1482
      %1497 = vmatmul.bf16.gmra.mxu0 %v1487
      %v1498 = vpop.f32.mrf.mxu0
      %v1499 = vadd.f32 %v1472, %v1498
      %v1500 = vpop.f32.mrf.mxu0
      %1501 = vdwg.mxu0
      %1502 = vst [vmem:[%s489] sm:$0xff] %v1499
      %p1503 = scmp.lt.s32.totalorder %s26, 1
      %s1504 = scalar_select %p1503, %s26, 1
      %s1505 = smul.addr %s1504, 8
      %s1506 = scalar_lea.vmem %s15, %s1505
      // Predicated region
      $region81: #{seq_encoder_only_forward.1} parent=79 // pred_check
        %p1507 = pneg %p364
      $region82: #{seq_encoder_only_forward.1} parent=79 // pred_check_branch
        %1509 = sbr.rel (%p1507) target = $region84
      $region83: #{seq_encoder_only_forward.1} parent=79 // pred_region
        _
      $region84: #{seq_encoder_only_forward.1} parent=79 // pred_fallthru
        _
    $region80: #{seq_encoder_only_forward.1} parent=5 // pred_fallthru
      _
    %p1510 = scmp.le.s32.totalorder 2, %s21
    // Predicated region
    $region85: #{seq_encoder_only_forward.1} parent=5 // pred_check
      %p1511 = pneg %p1510
    $region86: #{seq_encoder_only_forward.1} parent=5 // pred_check_branch
      %1513 = sbr.rel (%p1511) target = $region88
    $region87: #{seq_encoder_only_forward.1} parent=5 // pred_region
      %s1514 = ssub.s32 %s21, 2
      // Predicated region
      $region89: #{seq_encoder_only_forward.1} parent=87 // pred_check
        %p1515 = pneg %p370
      $region90: #{seq_encoder_only_forward.1} parent=87 // pred_check_branch
        %1517 = sbr.rel (%p1515) target = $region92
      $region91: #{seq_encoder_only_forward.1} parent=87 // pred_region
        %p1518 = scmp.lt.s32.totalorder %s27, 1
        %s1519 = scalar_select %p1518, %s27, 1
        %s1520 = smul.addr %s1519, 8
        %s1521 = scalar_lea.vmem %s15, %s1520
      $region92: #{seq_encoder_only_forward.1} parent=87 // pred_fallthru
        _
    $region88: #{seq_encoder_only_forward.1} parent=5 // pred_fallthru
      _
  $region6: #{seq_encoder_only_forward.1} parent=0 // loop_footer
    %s25 = sadd.s32 1, %s21
  $region7: #{seq_encoder_only_forward.1} parent=0 // loop_footer_branch
    %20 = sbr.rel target = $region3
  $region8: #{seq_encoder_only_forward.1} parent=0 // loop_exit
    _

</llo_original>
